<compile_context>
chip_gen: v6e
topology: v6e:2x2x1
jax: 0.10.0
libtpu: 0.0.40
codegen_flags: <defaults>
</compile_context>

<pallas_src>
import functools

import numpy as np
import jax
import jax.numpy as jnp
from jax.experimental import pallas as pl
from jax.experimental.pallas import tpu as pltpu


# ----------------------------------------------------------------------------
# Fused kernel: conv1 -> conv2 -> fc1 -> fc2 -> fc3, spike MLP, projection.
# ----------------------------------------------------------------------------
def _fused_kernel(xcat_ref, sp_ref, w1_ref, w2_ref, sm_ref, out_ref,
                  *, B, T, K1, K2, offs):
    f32 = jnp.float32

    def sm(name):  # static, sublane-aligned row/lane slice of the small slab
        o, r, c = offs[name]
        return sm_ref[o:o + r, 0:c]

    # conv1 at all k2 row shifts (stacked along lanes) + ReLU:
    #   (R, (k1+k2-1)*W*Cin) @ (K1, k2*D1)  ->  (R, k2*D1)
    wide1 = jnp.maximum(
        jnp.dot(xcat_ref[...], w1_ref[0:K1, :], preferred_element_type=f32)
        + w1_ref[K1:K1 + 1, :], 0.0)

    # conv2 + ReLU:  (R, k2*D1) @ (K2, D2)  ->  (R, D2)
    relu2 = jnp.maximum(
        jnp.dot(wide1, w2_ref[0:K2, :], preferred_element_type=f32)
        + w2_ref[K2:K2 + 1, :], 0.0)

    # fc1: expand to (R, H*nc), keep only the i'==i (diagonal) terms via the
    # 0/1 mask, reduce rows per batch with a 0/1 matmul, collapse the H image
    # rows with another 0/1 matmul, then bias + ReLU.
    m = jnp.dot(relu2, sm("wcat"), preferred_element_type=f32) * sm("mask")
    q = jnp.dot(sm("sel"), m, preferred_element_type=f32)            # (B, H*nc)
    x_fc1 = jnp.maximum(
        jnp.dot(q, sm("gcol"), preferred_element_type=f32) + sm("b_fc1"),
        0.0)                                                          # (B, nc)

    # fc2 / fc3 stimulus head
    x_fc2 = jnp.maximum(
        jnp.dot(x_fc1, sm("w_fc2"), preferred_element_type=f32) + sm("b_fc2"),
        0.0)                                                          # (B, 64)
    aa = jnp.maximum(
        jnp.dot(x_fc2, sm("w_fc3"), preferred_element_type=f32) + sm("b_fc3"),
        0.0)                                                          # (B, 1)

    # spike MLP, fully vreg resident
    sp = sp_ref[...]                                                  # (B*T, nc)
    sp = jnp.maximum(jnp.dot(sp, sm("w_s1"), preferred_element_type=f32)
                     + sm("b_s1"), 0.0)
    sp = jnp.maximum(jnp.dot(sp, sm("w_s2"), preferred_element_type=f32)
                     + sm("b_s2"), 0.0)
    sp = jnp.maximum(jnp.dot(sp, sm("w_s3"), preferred_element_type=f32)
                     + sm("b_s3"), 0.0)                               # (B*T, nc)

    # projection: out[b, t] = relu(fc3)[b] + <sp[b*T + t, :], x_fc1[b, :]>
    proj = jax.lax.dot_general(x_fc1, sp, (((1,), (1,)), ((), ())),
                               preferred_element_type=f32)            # (B, B*T)
    for b in range(B):
        out_ref[b:b + 1, :] = aa[b:b + 1, 0:1] + proj[b:b + 1, b * T:(b + 1) * T]


# ----------------------------------------------------------------------------
# Parameter packing (done ONCE at init).
# ----------------------------------------------------------------------------
def _pack_small(entries):
    """Stack small f32 matrices into one slab.

    Every entry is padded to a multiple of 8 rows (so in-kernel row slices
    are sublane-aligned) and to a common lane width.  Returns the slab and a
    dict {name: (row_offset, rows, cols)}.
    """
    width = max(int(np.asarray(a).shape[-1]) for _, a in entries)
    blocks, offs, n = [], {}, 0
    for name, arr in entries:
        arr = np.asarray(arr, np.float32)
        if arr.ndim == 1:
            arr = arr[None, :]
        r, c = arr.shape
        rp = r + (-r) % 8
        blk = np.zeros((rp, width), np.float32)
        blk[:r, :c] = arr
        offs[name] = (n, r, c)
        blocks.append(blk)
        n += rp
    return np.concatenate(blocks, axis=0), offs


def prepare_params(params, *, B, H, W, k1, k2, n_cell):
    w1 = np.asarray(params["conv1_w"], np.float32)      # (nF1, Cin, k1, k1)
    w2 = np.asarray(params["conv2_w"], np.float32)      # (nF2, nF1, k2, k2)
    b1 = np.asarray(params["conv1_b"], np.float32)
    b2 = np.asarray(params["conv2_b"], np.float32)
    nF1, Cin = w1.shape[0], w1.shape[1]
    nF2 = w2.shape[0]
    Ho1, Wo1 = H - k1 + 1, W - k1 + 1
    Ho2, Wo2 = Ho1 - k2 + 1, Wo1 - k2 + 1
    D1, D2 = Wo1 * nF1, Wo2 * nF2
    WCin = W * Cin
    win = k1 + k2 - 1
    K1, K2 = win * WCin, k2 * D1
    R = B * H

    # conv1 fused weight: rows = (d, w, ci) over the (k1+k2-1)-row input
    # window; cols = (dj, wo, co) = conv1 output at row-shift dj.
    w1wide = np.zeros((K1, k2 * D1), np.float32)
    for dj in range(k2):
        for d1 in range(k1):
            for dw in range(k1):
                blk = w1[:, :, d1, dw].T                 # (Cin, nF1)
                for wo in range(Wo1):
                    r0 = (dj + d1) * WCin + (wo + dw) * Cin
                    c0 = dj * D1 + wo * nF1
                    w1wide[r0:r0 + Cin, c0:c0 + nF1] = blk
    b1wide = np.tile(np.tile(b1, Wo1), k2)

    # conv2 banded weight: rows = (dj, w', c1), cols = (wo, c2).
    w2big = np.zeros((K2, D2), np.float32)
    for dj in range(k2):
        for dw in range(k2):
            blk = w2[:, :, dj, dw].T                     # (nF1, nF2)
            for wo in range(Wo2):
                r0 = dj * D1 + (wo + dw) * nF1
                w2big[r0:r0 + nF1, wo * nF2:(wo + 1) * nF2] = blk
    b2row = np.tile(b2, Wo2)

    # Weight slabs with the bias appended as row index K (rest zero pad).
    w1_slab = np.zeros((K1 + 8, k2 * D1), np.float32)
    w1_slab[:K1] = w1wide
    w1_slab[K1] = b1wide
    w2_slab = np.zeros((K2 + 8, D2), np.float32)
    w2_slab[:K2] = w2big
    w2_slab[K2] = b2row

    # fc1 expand / mask / collapse (torch flatten order (c, i, j)); columns
    # with image row i >= Ho2 stay zero so garbage conv rows contribute 0.
    fc1_w4 = np.asarray(params["fc1_w"], np.float32).reshape(n_cell, nF2, Ho2, Wo2)
    wcat = np.zeros((D2, H * n_cell), np.float32)
    for i in range(Ho2):
        for j in range(Wo2):
            for c in range(nF2):
                wcat[j * nF2 + c, i * n_cell:(i + 1) * n_cell] = fc1_w4[:, c, i, j]
    maskR = np.zeros((R, H * n_cell), np.float32)        # keep only i' == i
    for b in range(B):
        for i in range(H):
            maskR[b * H + i, i * n_cell:(i + 1) * n_cell] = 1.0
    sel = np.zeros((B, R), np.float32)                   # per-batch row reduce
    for b in range(B):
        sel[b, b * H:(b + 1) * H] = 1.0
    gcol = np.tile(np.eye(n_cell, dtype=np.float32), (H, 1))   # (H*nc, nc)

    def t(name):   # torch Linear weight (out, in) -> pre-transposed (in, out)
        return np.asarray(params[name], np.float32).T

    def r(name):   # bias -> (1, N) row
        return np.asarray(params[name], np.float32)[None, :]

    small_slab, offs = _pack_small([
        ("wcat", wcat), ("mask", maskR), ("sel", sel), ("gcol", gcol),
        ("w_fc2", t("fc2_w")), ("w_fc3", t("fc3_w")),
        ("w_s1", t("fcS1_w")), ("w_s2", t("fcS2_w")), ("w_s3", t("fcS3_w")),
        ("b_fc1", r("fc1_b")), ("b_fc2", r("fc2_b")), ("b_fc3", r("fc3_b")),
        ("b_s1", r("fcS1_b")), ("b_s2", r("fcS2_b")), ("b_s3", r("fcS3_b")),
    ])

    prep = {"w1_slab": jnp.asarray(w1_slab),
            "w2_slab": jnp.asarray(w2_slab),
            "small_slab": jnp.asarray(small_slab)}
    cfg = dict(K1=K1, K2=K2, win=win, offs=offs)
    return prep, cfg


# ----------------------------------------------------------------------------
# Forward wrapper: tiny XLA-side im2row of stim (fused with the transpose),
# one reshape of spike, then a single fused pallas_call with 5 inputs.
# ----------------------------------------------------------------------------
def forward(prep, cfg, spike, stim):
    B, Cin, H, W = stim.shape
    _, T, n_cell = spike.shape
    R = B * H
    win = cfg["win"]

    xg = stim.astype(jnp.float32).transpose(0, 2, 3, 1).reshape(R, W * Cin)
    xg = jnp.pad(xg, ((0, win - 1), (0, 0)))
    xcat = jnp.concatenate([xg[d:d + R, :] for d in range(win)], axis=1)
    sp2d = spike.astype(jnp.float32).reshape(B * T, n_cell)

    kernel = functools.partial(_fused_kernel, B=B, T=T,
                               K1=cfg["K1"], K2=cfg["K2"], offs=cfg["offs"])
    inputs = (xcat, sp2d, prep["w1_slab"], prep["w2_slab"], prep["small_slab"])

    return pl.pallas_call(
        kernel,
        out_shape=jax.ShapeDtypeStruct((B, T), jnp.float32),
        in_specs=[pl.BlockSpec(memory_space=pltpu.MemorySpace.VMEM)] * len(inputs),
        out_specs=pl.BlockSpec(memory_space=pltpu.MemorySpace.VMEM),
    )(*inputs)


# ----------------------------------------------------------------------------
# Parameter init (spectral norm applied once, deterministically) + reference.
# ----------------------------------------------------------------------------
def spectral_normalize(w, n_iter=10):
    w2d = w.reshape(w.shape[0], -1)
    v = jnp.ones((w2d.shape[1],), jnp.float32) / jnp.sqrt(w2d.shape[1])
    for _ in range(n_iter):
        u = w2d @ v
        u = u / (jnp.linalg.norm(u) + 1e-12)
        v = w2d.T @ u
        v = v / (jnp.linalg.norm(v) + 1e-12)
    sigma = u @ (w2d @ v)
    return w / sigma


def init_params(key, nl, nf1, nf2, k1, k2, n_cell, fc_in):
    ks = jax.random.split(key, 18)

    def w(k, shape):
        return spectral_normalize(jax.random.normal(k, shape, jnp.float32) * 0.1)

    def bias(k, n):
        return jax.random.normal(k, (n,), jnp.float32) * 0.01

    return {
        "conv1_w": w(ks[0], (nf1, nl, k1, k1)),   "conv1_b": bias(ks[1], nf1),
        "conv2_w": w(ks[2], (nf2, nf1, k2, k2)),  "conv2_b": bias(ks[3], nf2),
        "fc1_w": w(ks[4], (n_cell, fc_in)),       "fc1_b": bias(ks[5], n_cell),
        "fc2_w": w(ks[6], (64, n_cell)),          "fc2_b": bias(ks[7], 64),
        "fc3_w": w(ks[8], (1, 64)),               "fc3_b": bias(ks[9], 1),
        "fcS1_w": w(ks[10], (32, n_cell)),        "fcS1_b": bias(ks[11], 32),
        "fcS2_w": w(ks[12], (64, 32)),            "fcS2_b": bias(ks[13], 64),
        "fcS3_w": w(ks[14], (n_cell, 64)),        "fcS3_b": bias(ks[15], n_cell),
    }


def forward_ref(params, spike, stim):
    """Pure-JAX reference (high precision) for correctness checking."""
    hp = jax.lax.Precision.HIGHEST

    def conv(x, w, b):
        y = jax.lax.conv_general_dilated(
            x, w, window_strides=(1, 1), padding="VALID",
            dimension_numbers=("NCHW", "OIHW", "NCHW"), precision=hp)
        return jax.nn.relu(y + b[None, :, None, None])

    def dot(a, b):
        return jnp.dot(a, b, precision=hp)

    B = stim.shape[0]
    x = conv(conv(stim, params["conv1_w"], params["conv1_b"]),
             params["conv2_w"], params["conv2_b"])
    x_flat = x.reshape(B, -1)
    x_fc1 = jax.nn.relu(dot(x_flat, params["fc1_w"].T) + params["fc1_b"])
    x_fc2 = jax.nn.relu(dot(x_fc1, params["fc2_w"].T) + params["fc2_b"])
    sp = jax.nn.relu(dot(spike, params["fcS1_w"].T) + params["fcS1_b"])
    sp = jax.nn.relu(dot(sp, params["fcS2_w"].T) + params["fcS2_b"])
    sp = jax.nn.relu(dot(sp, params["fcS3_w"].T) + params["fcS3_b"])
    a = jax.nn.relu(dot(x_fc2, params["fc3_w"].T) + params["fc3_b"])
    b = jnp.einsum("btc,bc->bt", sp, x_fc1, precision=hp)
    return a + b


# TODO(synk): PyTorch spectral_norm's running power-iteration buffer update
# during training is not modeled; weights are spectrally normalized once at init.

if __name__ == "__main__":
    B, T = 2, 8
    nL, H, W = 4, 16, 16
    nF1, nF2 = 8, 8
    k1, k2 = 5, 3
    n_cell = 4
    Ho1, Wo1 = H - k1 + 1, W - k1 + 1
    Ho2, Wo2 = Ho1 - k2 + 1, Wo1 - k2 + 1
    fc_in = nF2 * Ho2 * Wo2

    key = jax.random.PRNGKey(0)
    kp, ksp, kst = jax.random.split(key, 3)
    params = init_params(kp, nL, nF1, nF2, k1, k2, n_cell, fc_in)
    spike = jax.random.normal(ksp, (B, T, n_cell), jnp.float32)
    stim = jax.random.normal(kst, (B, nL, H, W), jnp.float32)

    prep, cfg = prepare_params(params, B=B, H=H, W=W, k1=k1, k2=k2,
                               n_cell=n_cell)

    fwd = jax.jit(lambda sp, st: forward(prep, cfg, sp, st))
    out = jax.block_until_ready(fwd(spike, stim))

    ref = jax.block_until_ready(forward_ref(params, spike, stim))
    assert out.shape == (B, T), out.shape
    assert jnp.allclose(out, ref, atol=2e-3, rtol=2e-3), (
        float(jnp.max(jnp.abs(out - ref))))

    print("KERNEL_OK")
</pallas_src>

<mosaic_0001>
module attributes {stable_mosaic.version = 11 : i64} {
  func.func @_fused_kernel(%arg0: memref<32x448xf32, #tpu.memory_space<vmem>>, %arg1: memref<16x4xf32, #tpu.memory_space<vmem>>, %arg2: memref<456x288xf32, #tpu.memory_space<vmem>>, %arg3: memref<296x80xf32, #tpu.memory_space<vmem>>, %arg4: memref<408x64xf32, #tpu.memory_space<vmem>>, %arg5: memref<2x8xf32, #tpu.memory_space<vmem>>) attributes {dimension_semantics = [], scalar_prefetch = 0 : i64, scratch_operands = 0 : i64, tpu.core_type = #tpu.core_type<tc>} {
    %c0 = arith.constant 0 : index
    %c0_0 = arith.constant 0 : index
    %0 = vector.load %arg0[%c0, %c0_0] : memref<32x448xf32, #tpu.memory_space<vmem>>, vector<32x448xf32>
    %c0_1 = arith.constant 0 : index
    %c0_2 = arith.constant 0 : index
    %1 = vector.load %arg2[%c0_1, %c0_2] : memref<456x288xf32, #tpu.memory_space<vmem>>, vector<448x288xf32>
    %cst = arith.constant dense<0.000000e+00> : vector<32x288xf32>
    %2 = tpu.matmul %0, %1, %cst {dimension_numbers = #tpu.dot_dimension_numbers<[1], [0], [0], [1], [0, 0, 1, 1], [], []>} : vector<32x448xf32>, vector<448x288xf32>, vector<32x288xf32> -> vector<32x288xf32>
    %c448 = arith.constant 448 : index
    %c0_3 = arith.constant 0 : index
    %3 = vector.load %arg2[%c448, %c0_3] : memref<456x288xf32, #tpu.memory_space<vmem>>, vector<1x288xf32>
    %4 = vector.broadcast %3 : vector<1x288xf32> to vector<32x288xf32>
    %5 = arith.addf %2, %4 : vector<32x288xf32>
    %cst_4 = arith.constant 0.000000e+00 : f32
    %6 = vector.broadcast %cst_4 : f32 to vector<32x288xf32>
    %7 = arith.maximumf %5, %6 : vector<32x288xf32>
    %c0_5 = arith.constant 0 : index
    %c0_6 = arith.constant 0 : index
    %8 = vector.load %arg3[%c0_5, %c0_6] : memref<296x80xf32, #tpu.memory_space<vmem>>, vector<288x80xf32>
    %cst_7 = arith.constant dense<0.000000e+00> : vector<32x80xf32>
    %9 = tpu.matmul %7, %8, %cst_7 {dimension_numbers = #tpu.dot_dimension_numbers<[1], [0], [0], [1], [0, 0, 1, 1], [], []>} : vector<32x288xf32>, vector<288x80xf32>, vector<32x80xf32> -> vector<32x80xf32>
    %c288 = arith.constant 288 : index
    %c0_8 = arith.constant 0 : index
    %10 = vector.load %arg3[%c288, %c0_8] : memref<296x80xf32, #tpu.memory_space<vmem>>, vector<1x80xf32>
    %11 = vector.broadcast %10 : vector<1x80xf32> to vector<32x80xf32>
    %12 = arith.addf %9, %11 : vector<32x80xf32>
    %cst_9 = arith.constant 0.000000e+00 : f32
    %13 = vector.broadcast %cst_9 : f32 to vector<32x80xf32>
    %14 = arith.maximumf %12, %13 : vector<32x80xf32>
    %c0_10 = arith.constant 0 : index
    %c0_11 = arith.constant 0 : index
    %15 = vector.load %arg4[%c0_10, %c0_11] : memref<408x64xf32, #tpu.memory_space<vmem>>, vector<80x64xf32>
    %cst_12 = arith.constant dense<0.000000e+00> : vector<32x64xf32>
    %16 = tpu.matmul %14, %15, %cst_12 {dimension_numbers = #tpu.dot_dimension_numbers<[1], [0], [0], [1], [0, 0, 1, 1], [], []>} : vector<32x80xf32>, vector<80x64xf32>, vector<32x64xf32> -> vector<32x64xf32>
    %c80 = arith.constant 80 : index
    %c0_13 = arith.constant 0 : index
    %17 = vector.load %arg4[%c80, %c0_13] : memref<408x64xf32, #tpu.memory_space<vmem>>, vector<32x64xf32>
    %18 = arith.mulf %16, %17 : vector<32x64xf32>
    %c112 = arith.constant 112 : index
    %c0_14 = arith.constant 0 : index
    %19 = vector.load %arg4[%c112, %c0_14] : memref<408x64xf32, #tpu.memory_space<vmem>>, vector<2x32xf32>
    %cst_15 = arith.constant dense<0.000000e+00> : vector<2x64xf32>
    %20 = tpu.matmul %19, %18, %cst_15 {dimension_numbers = #tpu.dot_dimension_numbers<[1], [0], [0], [1], [0, 0, 1, 1], [], []>} : vector<2x32xf32>, vector<32x64xf32>, vector<2x64xf32> -> vector<2x64xf32>
    %c120 = arith.constant 120 : index
    %c0_16 = arith.constant 0 : index
    %21 = vector.load %arg4[%c120, %c0_16] : memref<408x64xf32, #tpu.memory_space<vmem>>, vector<64x4xf32>
    %cst_17 = arith.constant dense<0.000000e+00> : vector<2x4xf32>
    %22 = tpu.matmul %20, %21, %cst_17 {dimension_numbers = #tpu.dot_dimension_numbers<[1], [0], [0], [1], [0, 0, 1, 1], [], []>} : vector<2x64xf32>, vector<64x4xf32>, vector<2x4xf32> -> vector<2x4xf32>
    %c360 = arith.constant 360 : index
    %c0_18 = arith.constant 0 : index
    %23 = vector.load %arg4[%c360, %c0_18] : memref<408x64xf32, #tpu.memory_space<vmem>>, vector<1x4xf32>
    %24 = vector.broadcast %23 : vector<1x4xf32> to vector<2x4xf32>
    %25 = arith.addf %22, %24 : vector<2x4xf32>
    %cst_19 = arith.constant 0.000000e+00 : f32
    %26 = vector.broadcast %cst_19 : f32 to vector<2x4xf32>
    %27 = arith.maximumf %25, %26 : vector<2x4xf32>
    %c184 = arith.constant 184 : index
    %c0_20 = arith.constant 0 : index
    %28 = vector.load %arg4[%c184, %c0_20] : memref<408x64xf32, #tpu.memory_space<vmem>>, vector<4x64xf32>
    %cst_21 = arith.constant dense<0.000000e+00> : vector<2x64xf32>
    %29 = tpu.matmul %27, %28, %cst_21 {dimension_numbers = #tpu.dot_dimension_numbers<[1], [0], [0], [1], [0, 0, 1, 1], [], []>} : vector<2x4xf32>, vector<4x64xf32>, vector<2x64xf32> -> vector<2x64xf32>
    %c368 = arith.constant 368 : index
    %c0_22 = arith.constant 0 : index
    %30 = vector.load %arg4[%c368, %c0_22] : memref<408x64xf32, #tpu.memory_space<vmem>>, vector<1x64xf32>
    %31 = vector.broadcast %30 : vector<1x64xf32> to vector<2x64xf32>
    %32 = arith.addf %29, %31 : vector<2x64xf32>
    %cst_23 = arith.constant 0.000000e+00 : f32
    %33 = vector.broadcast %cst_23 : f32 to vector<2x64xf32>
    %34 = arith.maximumf %32, %33 : vector<2x64xf32>
    %c192 = arith.constant 192 : index
    %c0_24 = arith.constant 0 : index
    %35 = vector.load %arg4[%c192, %c0_24] : memref<408x64xf32, #tpu.memory_space<vmem>>, vector<64x1xf32>
    %cst_25 = arith.constant dense<0.000000e+00> : vector<2x1xf32>
    %36 = tpu.matmul %34, %35, %cst_25 {dimension_numbers = #tpu.dot_dimension_numbers<[1], [0], [0], [1], [0, 0, 1, 1], [], []>} : vector<2x64xf32>, vector<64x1xf32>, vector<2x1xf32> -> vector<2x1xf32>
    %c376 = arith.constant 376 : index
    %c0_26 = arith.constant 0 : index
    %37 = vector.load %arg4[%c376, %c0_26] : memref<408x64xf32, #tpu.memory_space<vmem>>, vector<1x1xf32>
    %38 = vector.broadcast %37 : vector<1x1xf32> to vector<2x1xf32>
    %39 = arith.addf %36, %38 : vector<2x1xf32>
    %cst_27 = arith.constant 0.000000e+00 : f32
    %40 = vector.broadcast %cst_27 : f32 to vector<2x1xf32>
    %41 = arith.maximumf %39, %40 : vector<2x1xf32>
    %c0_28 = arith.constant 0 : index
    %c0_29 = arith.constant 0 : index
    %42 = vector.load %arg1[%c0_28, %c0_29] : memref<16x4xf32, #tpu.memory_space<vmem>>, vector<16x4xf32>
    %c256 = arith.constant 256 : index
    %c0_30 = arith.constant 0 : index
    %43 = vector.load %arg4[%c256, %c0_30] : memref<408x64xf32, #tpu.memory_space<vmem>>, vector<4x32xf32>
    %cst_31 = arith.constant dense<0.000000e+00> : vector<16x32xf32>
    %44 = tpu.matmul %42, %43, %cst_31 {dimension_numbers = #tpu.dot_dimension_numbers<[1], [0], [0], [1], [0, 0, 1, 1], [], []>} : vector<16x4xf32>, vector<4x32xf32>, vector<16x32xf32> -> vector<16x32xf32>
    %c384 = arith.constant 384 : index
    %c0_32 = arith.constant 0 : index
    %45 = vector.load %arg4[%c384, %c0_32] : memref<408x64xf32, #tpu.memory_space<vmem>>, vector<1x32xf32>
    %46 = vector.broadcast %45 : vector<1x32xf32> to vector<16x32xf32>
    %47 = arith.addf %44, %46 : vector<16x32xf32>
    %cst_33 = arith.constant 0.000000e+00 : f32
    %48 = vector.broadcast %cst_33 : f32 to vector<16x32xf32>
    %49 = arith.maximumf %47, %48 : vector<16x32xf32>
    %c264 = arith.constant 264 : index
    %c0_34 = arith.constant 0 : index
    %50 = vector.load %arg4[%c264, %c0_34] : memref<408x64xf32, #tpu.memory_space<vmem>>, vector<32x64xf32>
    %cst_35 = arith.constant dense<0.000000e+00> : vector<16x64xf32>
    %51 = tpu.matmul %49, %50, %cst_35 {dimension_numbers = #tpu.dot_dimension_numbers<[1], [0], [0], [1], [0, 0, 1, 1], [], []>} : vector<16x32xf32>, vector<32x64xf32>, vector<16x64xf32> -> vector<16x64xf32>
    %c392 = arith.constant 392 : index
    %c0_36 = arith.constant 0 : index
    %52 = vector.load %arg4[%c392, %c0_36] : memref<408x64xf32, #tpu.memory_space<vmem>>, vector<1x64xf32>
    %53 = vector.broadcast %52 : vector<1x64xf32> to vector<16x64xf32>
    %54 = arith.addf %51, %53 : vector<16x64xf32>
    %cst_37 = arith.constant 0.000000e+00 : f32
    %55 = vector.broadcast %cst_37 : f32 to vector<16x64xf32>
    %56 = arith.maximumf %54, %55 : vector<16x64xf32>
    %c296 = arith.constant 296 : index
    %c0_38 = arith.constant 0 : index
    %57 = vector.load %arg4[%c296, %c0_38] : memref<408x64xf32, #tpu.memory_space<vmem>>, vector<64x4xf32>
    %cst_39 = arith.constant dense<0.000000e+00> : vector<16x4xf32>
    %58 = tpu.matmul %56, %57, %cst_39 {dimension_numbers = #tpu.dot_dimension_numbers<[1], [0], [0], [1], [0, 0, 1, 1], [], []>} : vector<16x64xf32>, vector<64x4xf32>, vector<16x4xf32> -> vector<16x4xf32>
    %c400 = arith.constant 400 : index
    %c0_40 = arith.constant 0 : index
    %59 = vector.load %arg4[%c400, %c0_40] : memref<408x64xf32, #tpu.memory_space<vmem>>, vector<1x4xf32>
    %60 = vector.broadcast %59 : vector<1x4xf32> to vector<16x4xf32>
    %61 = arith.addf %58, %60 : vector<16x4xf32>
    %cst_41 = arith.constant 0.000000e+00 : f32
    %62 = vector.broadcast %cst_41 : f32 to vector<16x4xf32>
    %63 = arith.maximumf %61, %62 : vector<16x4xf32>
    %cst_42 = arith.constant dense<0.000000e+00> : vector<2x16xf32>
    %64 = tpu.matmul %27, %63, %cst_42 {dimension_numbers = #tpu.dot_dimension_numbers<[1], [1], [0], [0], [0, 0, 1, 0], [], []>} : vector<2x4xf32>, vector<16x4xf32>, vector<2x16xf32> -> vector<2x16xf32>
    %65 = vector.extract_strided_slice %41 {offsets = [0, 0], sizes = [1, 1], strides = [1, 1]} : vector<2x1xf32> to vector<1x1xf32>
    %66 = vector.extract_strided_slice %64 {offsets = [0, 0], sizes = [1, 8], strides = [1, 1]} : vector<2x16xf32> to vector<1x8xf32>
    %67 = vector.broadcast %65 : vector<1x1xf32> to vector<1x8xf32>
    %68 = arith.addf %67, %66 : vector<1x8xf32>
    %c0_43 = arith.constant 0 : index
    %c0_44 = arith.constant 0 : index
    %69 = vector.load %arg5[%c0_43, %c0_44] : memref<2x8xf32, #tpu.memory_space<vmem>>, vector<1x8xf32>
    tpu.vector_store %arg5[%c0_43, %c0_44], %68 {strides = array<i32>} : memref<2x8xf32, #tpu.memory_space<vmem>>, vector<1x8xf32>,
    %70 = vector.extract_strided_slice %41 {offsets = [1, 0], sizes = [1, 1], strides = [1, 1]} : vector<2x1xf32> to vector<1x1xf32>
    %71 = vector.extract_strided_slice %64 {offsets = [1, 8], sizes = [1, 8], strides = [1, 1]} : vector<2x16xf32> to vector<1x8xf32>
    %72 = vector.broadcast %70 : vector<1x1xf32> to vector<1x8xf32>
    %73 = arith.addf %72, %71 : vector<1x8xf32>
    %c1 = arith.constant 1 : index
    %c0_45 = arith.constant 0 : index
    %74 = vector.load %arg5[%c1, %c0_45] : memref<2x8xf32, #tpu.memory_space<vmem>>, vector<1x8xf32>
    tpu.vector_store %arg5[%c1, %c0_45], %73 {strides = array<i32>} : memref<2x8xf32, #tpu.memory_space<vmem>>, vector<1x8xf32>,
    return
  }
}

</mosaic_0001>

<llo_original>
// kernel: _lambda_.1
$region0: #{_lambda_.1}
  #allocation0 [shape = 'u32[]', space=smem, size = 0x4, offset = 0x4, fixed_abs, tag = 'smem constant byte address 0x4 - core index']
  #allocation1 [shape = 'u32[144,128]{1,0:T(1,128)}', space=vmem, size = 0x12000, scoped, tag = 'internal scratch']
  %s0 = inlined_call_operand.vmem [shape: f32[32,448], index: 0, kind: input, shape index: {}]
  %s1 = inlined_call_operand.vmem [shape: f32[16,4], index: 1, kind: input, shape index: {}]
  %s2 = inlined_call_operand.hbm [shape: f32[456,288], index: 2, kind: input, shape index: {}]
  %s3 = inlined_call_operand.vmem [shape: f32[296,80], index: 3, kind: input, shape index: {}]
  %s4 = inlined_call_operand.vmem [shape: f32[408,64], index: 4, kind: input, shape index: {}]
  %s5 = inlined_call_operand.hbm [shape: f32[2,8], index: 5, kind: output, shape index: {}]
  %s6 = sld [smem:[#allocation0]]
  $region34: #{_lambda_.1} parent=0
    _
  %s8 = ssub.s32 1, %s6
  %s9 = scalar_select 0, %s8, %s6
  $region1: #{_lambda_.1} parent=0
    #allocation2 [shape = 'u8[700416]{0}', space=vmem, size = 0xab000, scoped, tag = 'input window, operand 2, single buffered']
    #allocation3 [shape = 's32[1]{0}', space=sflag, size = 0x4, scoped, tag = 'scoped memory for _lambda_.1']
    #allocation4 [shape = 's32[1]{0}', space=sflag, size = 0x4, scoped, tag = 'scoped memory for _lambda_.1']
    #allocation5 [shape = 'u8[1024]{0}', space=vmem, size = 0x400, scoped, tag = 'output window, operand 0, single buffered']
    %10 = vsyncpa [#allocation3], 0
    %11 = vsyncpa [#allocation4], 0
    // Predicated region
    $region2: #{_lambda_.1} parent=1 // pred_check
      _
    $region3: #{_lambda_.1} parent=1 // pred_check_branch
      %13 = sbr.rel (0) target = $region5
    $region4: #{_lambda_.1} parent=1 // pred_region
      _
    $region5: #{_lambda_.1} parent=1 // pred_fallthru
      _
    // Predicated region
    $region6: #{_lambda_.1} parent=1 // pred_check
      _
    $region7: #{_lambda_.1} parent=1 // pred_check_branch
      %15 = sbr.rel (0) target = $region9
    $region8: #{_lambda_.1} parent=1 // pred_region
      _
    $region9: #{_lambda_.1} parent=1 // pred_fallthru
      _
    // Predicated region
    $region10: #{_lambda_.1} parent=1 // pred_check
      _
    $region11: #{_lambda_.1} parent=1 // pred_check_branch
      %17 = sbr.rel (0) target = $region13
    $region12: #{_lambda_.1} parent=1 // pred_region
      %s19 = ssub.s32 21888, 21888
      %20 = vsyncadd [#allocation3], %s19
      %s21 = sshll.u32 [#allocation2], 4
      %s22 = int_to_ptr.vmem [resolvable:$true] %s21
      %27 = dma.hbm_to_vmem [thread:$0]  %s2, 21888, %s22, [#allocation3], 384, 384, 24
    $region13: #{_lambda_.1} parent=1 // pred_fallthru
      _
    // Predicated region
    $region14: #{_lambda_.1} parent=1 // pred_check
      _
    $region15: #{_lambda_.1} parent=1 // pred_check_branch
      %29 = sbr.rel (0) target = $region17
    $region16: #{_lambda_.1} parent=1 // pred_region
      _
    $region17: #{_lambda_.1} parent=1 // pred_fallthru
      _
    // Predicated region
    $region18: #{_lambda_.1} parent=1 // pred_check
      _
    $region19: #{_lambda_.1} parent=1 // pred_check_branch
      %31 = sbr.rel (0) target = $region21
    $region20: #{_lambda_.1} parent=1 // pred_region
      _
    $region21: #{_lambda_.1} parent=1 // pred_fallthru
      _
    // Predicated region
    $region22: #{_lambda_.1} parent=1 // pred_check
      _
    $region23: #{_lambda_.1} parent=1 // pred_check_branch
      %33 = sbr.rel (0) target = $region25
    $region24: #{_lambda_.1} parent=1 // pred_region
      %34 = dma.done [#allocation3], 21888
    $region25: #{_lambda_.1} parent=1 // pred_fallthru
      _
    %v35 = vld [vmem:[%s0] sm:$0xff]
    %v36 = vld [vmem:[%s0 + $0x8] sm:$0xff]
    %v37 = vld [vmem:[%s0 + $0x10] sm:$0xff]
    %v38 = vld [vmem:[%s0 + $0x18] sm:$0xff]
    %v39 = vld [vmem:[%s0 + $0x20] sm:$0xff]
    %v40 = vld [vmem:[%s0 + $0x28] sm:$0xff]
    %v41 = vld [vmem:[%s0 + $0x30] sm:$0xff]
    %v42 = vld [vmem:[%s0 + $0x38] sm:$0xff]
    %v43 = vld [vmem:[%s0 + $0x40] sm:$0xff]
    %v44 = vld [vmem:[%s0 + $0x48] sm:$0xff]
    %v45 = vld [vmem:[%s0 + $0x50] sm:$0xff]
    %v46 = vld [vmem:[%s0 + $0x58] sm:$0xff]
    %v47 = vld [vmem:[%s0 + $0x60] sm:$0xff]
    %v48 = vld [vmem:[%s0 + $0x68] sm:$0xff]
    %v49 = vld [vmem:[%s0 + $0x70] sm:$0xff]
    %v50 = vld [vmem:[%s0 + $0x78] sm:$0xff]
    %v51 = vld [vmem:[#allocation2] sm:$0xff]
    %v52 = vld [vmem:[#allocation2 + $0x8] sm:$0xff]
    %v53 = vld [vmem:[#allocation2 + $0x10] sm:$0xff]
    %v54 = vld [vmem:[#allocation2 + $0x18] sm:$0xff]
    %v55 = vld [vmem:[#allocation2 + $0x20] sm:$0xff]
    %v56 = vld [vmem:[#allocation2 + $0x28] sm:$0xff]
    %v57 = vld [vmem:[#allocation2 + $0x30] sm:$0xff]
    %v58 = vld [vmem:[#allocation2 + $0x38] sm:$0xff]
    %v59 = vld [vmem:[#allocation2 + $0x40] sm:$0xff]
    %v60 = vld [vmem:[#allocation2 + $0x48] sm:$0xff]
    %v61 = vld [vmem:[#allocation2 + $0x50] sm:$0xff]
    %v62 = vld [vmem:[#allocation2 + $0x58] sm:$0xff]
    %v63 = vld [vmem:[#allocation2 + $0x60] sm:$0xff]
    %v64 = vld [vmem:[#allocation2 + $0x68] sm:$0xff]
    %v65 = vld [vmem:[#allocation2 + $0x70] sm:$0xff]
    %v66 = vld [vmem:[#allocation2 + $0x78] sm:$0xff]
    %v67 = vld [vmem:[#allocation2 + $0x80] sm:$0xff]
    %v68 = vld [vmem:[#allocation2 + $0x88] sm:$0xff]
    %v69 = vld [vmem:[#allocation2 + $0x90] sm:$0xff]
    %v70 = vld [vmem:[#allocation2 + $0x98] sm:$0xff]
    %v71 = vld [vmem:[#allocation2 + $0xa0] sm:$0xff]
    %v72 = vld [vmem:[#allocation2 + $0xa8] sm:$0xff]
    %v73 = vld [vmem:[#allocation2 + $0xb0] sm:$0xff]
    %v74 = vld [vmem:[#allocation2 + $0xb8] sm:$0xff]
    %v75 = vld [vmem:[#allocation2 + $0xc0] sm:$0xff]
    %v76 = vld [vmem:[#allocation2 + $0xc8] sm:$0xff]
    %v77 = vld [vmem:[#allocation2 + $0xd0] sm:$0xff]
    %v78 = vld [vmem:[#allocation2 + $0xd8] sm:$0xff]
    %v79 = vld [vmem:[#allocation2 + $0xe0] sm:$0xff]
    %v80 = vld [vmem:[#allocation2 + $0xe8] sm:$0xff]
    %v81 = vld [vmem:[#allocation2 + $0xf0] sm:$0xff]
    %v82 = vld [vmem:[#allocation2 + $0xf8] sm:$0xff]
    %v83 = vld [vmem:[#allocation2 + $0x100] sm:$0xff]
    %v84 = vld [vmem:[#allocation2 + $0x108] sm:$0xff]
    %v85 = vld [vmem:[#allocation2 + $0x110] sm:$0xff]
    %v86 = vld [vmem:[#allocation2 + $0x118] sm:$0xff]
    %v87 = vld [vmem:[#allocation2 + $0x120] sm:$0xff]
    %v88 = vld [vmem:[#allocation2 + $0x128] sm:$0xff]
    %v89 = vld [vmem:[#allocation2 + $0x130] sm:$0xff]
    %v90 = vld [vmem:[#allocation2 + $0x138] sm:$0xff]
    %v91 = vld [vmem:[#allocation2 + $0x140] sm:$0xff]
    %v92 = vld [vmem:[#allocation2 + $0x148] sm:$0xff]
    %v93 = vld [vmem:[#allocation2 + $0x150] sm:$0xff]
    %v94 = vld [vmem:[#allocation2 + $0x158] sm:$0xff]
    %v95 = vld [vmem:[#allocation2 + $0x160] sm:$0xff]
    %v96 = vld [vmem:[#allocation2 + $0x168] sm:$0xff]
    %v97 = vld [vmem:[#allocation2 + $0x170] sm:$0xff]
    %v98 = vld [vmem:[#allocation2 + $0x178] sm:$0xff]
    %v99 = vld [vmem:[#allocation2 + $0x180] sm:$0xff]
    %v100 = vld [vmem:[#allocation2 + $0x188] sm:$0xff]
    %v101 = vld [vmem:[#allocation2 + $0x190] sm:$0xff]
    %v102 = vld [vmem:[#allocation2 + $0x198] sm:$0xff]
    %v103 = vld [vmem:[#allocation2 + $0x1a0] sm:$0xff]
    %v104 = vld [vmem:[#allocation2 + $0x1a8] sm:$0xff]
    %v105 = vld [vmem:[#allocation2 + $0x1b0] sm:$0xff]
    %v106 = vld [vmem:[#allocation2 + $0x1b8] sm:$0xff]
    %v107 = vld [vmem:[#allocation2 + $0x1c0] sm:$0xff]
    %v108 = vld [vmem:[#allocation2 + $0x1c8] sm:$0xff]
    %v109 = vld [vmem:[#allocation2 + $0x1d0] sm:$0xff]
    %v110 = vld [vmem:[#allocation2 + $0x1d8] sm:$0xff]
    %v111 = vld [vmem:[#allocation2 + $0x1e0] sm:$0xff]
    %v112 = vld [vmem:[#allocation2 + $0x1e8] sm:$0xff]
    %v113 = vld [vmem:[#allocation2 + $0x1f0] sm:$0xff]
    %v114 = vld [vmem:[#allocation2 + $0x1f8] sm:$0xff]
    %v115 = vld [vmem:[#allocation2 + $0x200] sm:$0xff]
    %v116 = vld [vmem:[#allocation2 + $0x208] sm:$0xff]
    %v117 = vld [vmem:[#allocation2 + $0x210] sm:$0xff]
    %v118 = vld [vmem:[#allocation2 + $0x218] sm:$0xff]
    %v119 = vld [vmem:[#allocation2 + $0x220] sm:$0xff]
    %v120 = vld [vmem:[#allocation2 + $0x228] sm:$0xff]
    %v121 = vld [vmem:[#allocation2 + $0x230] sm:$0xff]
    %v122 = vld [vmem:[#allocation2 + $0x238] sm:$0xff]
    %v123 = vld [vmem:[#allocation2 + $0x240] sm:$0xff]
    %v124 = vld [vmem:[#allocation2 + $0x248] sm:$0xff]
    %v125 = vld [vmem:[#allocation2 + $0x250] sm:$0xff]
    %v126 = vld [vmem:[#allocation2 + $0x258] sm:$0xff]
    %v127 = vld [vmem:[#allocation2 + $0x260] sm:$0xff]
    %v128 = vld [vmem:[#allocation2 + $0x268] sm:$0xff]
    %v129 = vld [vmem:[#allocation2 + $0x270] sm:$0xff]
    %v130 = vld [vmem:[#allocation2 + $0x278] sm:$0xff]
    %v131 = vld [vmem:[#allocation2 + $0x280] sm:$0xff]
    %v132 = vld [vmem:[#allocation2 + $0x288] sm:$0xff]
    %v133 = vld [vmem:[#allocation2 + $0x290] sm:$0xff]
    %v134 = vld [vmem:[#allocation2 + $0x298] sm:$0xff]
    %v135 = vld [vmem:[#allocation2 + $0x2a0] sm:$0xff]
    %v136 = vld [vmem:[#allocation2 + $0x2a8] sm:$0xff]
    %v137 = vld [vmem:[#allocation2 + $0x2b0] sm:$0xff]
    %v138 = vld [vmem:[#allocation2 + $0x2b8] sm:$0xff]
    %v139 = vld [vmem:[#allocation2 + $0x2c0] sm:$0xff]
    %v140 = vld [vmem:[#allocation2 + $0x2c8] sm:$0xff]
    %v141 = vld [vmem:[#allocation2 + $0x2d0] sm:$0xff]
    %v142 = vld [vmem:[#allocation2 + $0x2d8] sm:$0xff]
    %v143 = vld [vmem:[#allocation2 + $0x2e0] sm:$0xff]
    %v144 = vld [vmem:[#allocation2 + $0x2e8] sm:$0xff]
    %v145 = vld [vmem:[#allocation2 + $0x2f0] sm:$0xff]
    %v146 = vld [vmem:[#allocation2 + $0x2f8] sm:$0xff]
    %v147 = vld [vmem:[#allocation2 + $0x300] sm:$0xff]
    %v148 = vld [vmem:[#allocation2 + $0x308] sm:$0xff]
    %v149 = vld [vmem:[#allocation2 + $0x310] sm:$0xff]
    %v150 = vld [vmem:[#allocation2 + $0x318] sm:$0xff]
    %v151 = vld [vmem:[#allocation2 + $0x320] sm:$0xff]
    %v152 = vld [vmem:[#allocation2 + $0x328] sm:$0xff]
    %v153 = vld [vmem:[#allocation2 + $0x330] sm:$0xff]
    %v154 = vld [vmem:[#allocation2 + $0x338] sm:$0xff]
    %v155 = vld [vmem:[#allocation2 + $0x340] sm:$0xff]
    %v156 = vld [vmem:[#allocation2 + $0x348] sm:$0xff]
    %v157 = vld [vmem:[#allocation2 + $0x350] sm:$0xff]
    %v158 = vld [vmem:[#allocation2 + $0x358] sm:$0xff]
    %v159 = vld [vmem:[#allocation2 + $0x360] sm:$0xff]
    %v160 = vld [vmem:[#allocation2 + $0x368] sm:$0xff]
    %v161 = vld [vmem:[#allocation2 + $0x370] sm:$0xff]
    %v162 = vld [vmem:[#allocation2 + $0x378] sm:$0xff]
    %v163 = vld [vmem:[#allocation2 + $0x380] sm:$0xff]
    %v164 = vld [vmem:[#allocation2 + $0x388] sm:$0xff]
    %v165 = vld [vmem:[#allocation2 + $0x390] sm:$0xff]
    %v166 = vld [vmem:[#allocation2 + $0x398] sm:$0xff]
    %v167 = vld [vmem:[#allocation2 + $0x3a0] sm:$0xff]
    %v168 = vld [vmem:[#allocation2 + $0x3a8] sm:$0xff]
    %v169 = vld [vmem:[#allocation2 + $0x3b0] sm:$0xff]
    %v170 = vld [vmem:[#allocation2 + $0x3b8] sm:$0xff]
    %v171 = vld [vmem:[#allocation2 + $0x3c0] sm:$0xff]
    %v172 = vld [vmem:[#allocation2 + $0x3c8] sm:$0xff]
    %v173 = vld [vmem:[#allocation2 + $0x3d0] sm:$0xff]
    %v174 = vld [vmem:[#allocation2 + $0x3d8] sm:$0xff]
    %v175 = vld [vmem:[#allocation2 + $0x3e0] sm:$0xff]
    %v176 = vld [vmem:[#allocation2 + $0x3e8] sm:$0xff]
    %v177 = vld [vmem:[#allocation2 + $0x3f0] sm:$0xff]
    %v178 = vld [vmem:[#allocation2 + $0x3f8] sm:$0xff]
    %v179 = vld [vmem:[#allocation2 + $0x400] sm:$0xff]
    %v180 = vld [vmem:[#allocation2 + $0x408] sm:$0xff]
    %v181 = vld [vmem:[#allocation2 + $0x410] sm:$0xff]
    %v182 = vld [vmem:[#allocation2 + $0x418] sm:$0xff]
    %v183 = vld [vmem:[#allocation2 + $0x420] sm:$0xff]
    %v184 = vld [vmem:[#allocation2 + $0x428] sm:$0xff]
    %v185 = vld [vmem:[#allocation2 + $0x430] sm:$0xff]
    %v186 = vld [vmem:[#allocation2 + $0x438] sm:$0xff]
    %v187 = vld [vmem:[#allocation2 + $0x440] sm:$0xff]
    %v188 = vld [vmem:[#allocation2 + $0x448] sm:$0xff]
    %v189 = vld [vmem:[#allocation2 + $0x450] sm:$0xff]
    %v190 = vld [vmem:[#allocation2 + $0x458] sm:$0xff]
    %v191 = vld [vmem:[#allocation2 + $0x460] sm:$0xff]
    %v192 = vld [vmem:[#allocation2 + $0x468] sm:$0xff]
    %v193 = vld [vmem:[#allocation2 + $0x470] sm:$0xff]
    %v194 = vld [vmem:[#allocation2 + $0x478] sm:$0xff]
    %v195 = vld [vmem:[#allocation2 + $0x480] sm:$0xff]
    %v196 = vld [vmem:[#allocation2 + $0x488] sm:$0xff]
    %v197 = vld [vmem:[#allocation2 + $0x490] sm:$0xff]
    %v198 = vld [vmem:[#allocation2 + $0x498] sm:$0xff]
    %v199 = vld [vmem:[#allocation2 + $0x4a0] sm:$0xff]
    %v200 = vld [vmem:[#allocation2 + $0x4a8] sm:$0xff]
    %v201 = vld [vmem:[#allocation2 + $0x4b0] sm:$0xff]
    %v202 = vld [vmem:[#allocation2 + $0x4b8] sm:$0xff]
    %v203 = vld [vmem:[#allocation2 + $0x4c0] sm:$0xff]
    %v204 = vld [vmem:[#allocation2 + $0x4c8] sm:$0xff]
    %v205 = vld [vmem:[#allocation2 + $0x4d0] sm:$0xff]
    %v206 = vld [vmem:[#allocation2 + $0x4d8] sm:$0xff]
    %v207 = vld [vmem:[#allocation2 + $0x4e0] sm:$0xff]
    %v208 = vld [vmem:[#allocation2 + $0x4e8] sm:$0xff]
    %v209 = vld [vmem:[#allocation2 + $0x4f0] sm:$0xff]
    %v210 = vld [vmem:[#allocation2 + $0x4f8] sm:$0xff]
    %v211 = vld [vmem:[#allocation2 + $0x500] sm:$0xff]
    %v212 = vld [vmem:[#allocation2 + $0x508] sm:$0xff]
    %v213 = vld [vmem:[#allocation2 + $0x510] sm:$0xff]
    %v214 = vld [vmem:[#allocation2 + $0x518] sm:$0xff]
    %v215 = vld [vmem:[#allocation2 + $0x520] sm:$0xff]
    %v216 = vld [vmem:[#allocation2 + $0x528] sm:$0xff]
    %v217 = vld [vmem:[#allocation2 + $0x530] sm:$0xff]
    %v218 = vld [vmem:[#allocation2 + $0x538] sm:$0xff]
    %s219 = scalar_lea.vmem [#allocation2], 1344
    %v220 = vld [vmem:[%s219] ss:$8 sm:$0x7]
    %v222 = vlaneseq
    %v223 = vshrl.u32 %v222, 7
    %v224 = vsub.s32 0, %v223
    %v225 = vrot.slane %v220, %v224
    %v226 = vlaneseq
    %v227 = vshrl.u32 %v226, 7
    %v228 = vsub.s32 1, %v227
    %v229 = vrot.slane %v220, %v228
    %v230 = vlaneseq
    %v231 = vshrl.u32 %v230, 7
    %v232 = vsub.s32 2, %v231
    %v233 = vrot.slane %v220, %v232
    %vm237 = vcmask 523264
    %v239 = vsel %vm237, %v38, 0
    %v242 = vsel %vm237, %v42, 0
    %v245 = vsel %vm237, %v46, 0
    %v248 = vsel %vm237, %v50, 0
    %250 = vmatprep.subr.mxu0 %v97
    %251 = vmatpush1.msra.mxu0 %v96
    %252 = vmatprep.subr.mxu0 %v94
    %253 = vmatpush1.msra.mxu0 %v93
    %254 = vmatprep.subr.mxu0 %v91
    %255 = vmatpush1.msra.mxu0 %v90
    %256 = vmatprep.subr.mxu0 %v88
    %257 = vmatpush1.msra.mxu0 %v87
    %258 = vmatprep.subr.mxu0 %v85
    %259 = vmatpush1.msra.mxu0 %v84
    %260 = vmatprep.subr.mxu0 %v82
    %261 = vmatpush1.msra.mxu0 %v81
    %262 = vmatprep.subr.mxu0 %v79
    %263 = vmatpush1.msra.mxu0 %v78
    %264 = vmatprep.subr.mxu0 %v76
    %265 = vmatpush1.msra.mxu0 %v75
    %266 = vmatprep.subr.mxu0 %v73
    %267 = vmatpush1.msra.mxu0 %v72
    %268 = vmatprep.subr.mxu0 %v70
    %269 = vmatpush1.msra.mxu0 %v69
    %270 = vmatprep.subr.mxu0 %v67
    %271 = vmatpush1.msra.mxu0 %v66
    %272 = vmatprep.subr.mxu0 %v64
    %273 = vmatpush1.msra.mxu0 %v63
    %274 = vmatprep.subr.mxu0 %v61
    %275 = vmatpush1.msra.mxu0 %v60
    %276 = vmatprep.subr.mxu0 %v58
    %277 = vmatpush1.msra.mxu0 %v57
    %278 = vmatprep.subr.mxu0 %v55
    %279 = vmatpush1.msra.mxu0 %v54
    %280 = vmatprep.subr.mxu0 %v52
    %281 = vmatpush1.msra.mxu0 %v51
    %282 = vmatprep.subr.mxu0 %v145
    %283 = vmatpush2.msra.mxu0 %v144
    %284 = vmatprep.subr.mxu0 %v142
    %285 = vmatpush2.msra.mxu0 %v141
    %286 = vmatprep.subr.mxu0 %v139
    %287 = vmatpush2.msra.mxu0 %v138
    %288 = vmatprep.subr.mxu0 %v136
    %289 = vmatpush2.msra.mxu0 %v135
    %290 = vmatprep.subr.mxu0 %v133
    %291 = vmatpush2.msra.mxu0 %v132
    %292 = vmatprep.subr.mxu0 %v130
    %293 = vmatpush2.msra.mxu0 %v129
    %294 = vmatprep.subr.mxu0 %v127
    %295 = vmatpush2.msra.mxu0 %v126
    %296 = vmatprep.subr.mxu0 %v124
    %297 = vmatpush2.msra.mxu0 %v123
    %298 = vmatprep.subr.mxu0 %v121
    %299 = vmatpush2.msra.mxu0 %v120
    %300 = vmatprep.subr.mxu0 %v118
    %301 = vmatpush2.msra.mxu0 %v117
    %302 = vmatprep.subr.mxu0 %v115
    %303 = vmatpush2.msra.mxu0 %v114
    %304 = vmatprep.subr.mxu0 %v112
    %305 = vmatpush2.msra.mxu0 %v111
    %306 = vmatprep.subr.mxu0 %v109
    %307 = vmatpush2.msra.mxu0 %v108
    %308 = vmatprep.subr.mxu0 %v106
    %309 = vmatpush2.msra.mxu0 %v105
    %310 = vmatprep.subr.mxu0 %v103
    %311 = vmatpush2.msra.mxu0 %v102
    %312 = vmatprep.subr.mxu0 %v100
    %313 = vmatpush2.msra.mxu0 %v99
    %314 = vmatprep.mubr.f32.mxu0 %v36
    %315 = vmatmul.mubr.f32.gmra.mxu0 %v35
    %v316 = vpop.f32.mrf.mxu0
    %v317 = vadd.f32 %v225, %v316
    %v318 = vpop.f32.mrf.mxu0
    %v319 = vadd.f32 %v229, %v318
    %320 = vmatprep.mubr.f32.mxu0 %v40
    %321 = vmatmul.mubr.f32.gmra.mxu0 %v39
    %v322 = vpop.f32.mrf.mxu0
    %v323 = vadd.f32 %v225, %v322
    %v324 = vpop.f32.mrf.mxu0
    %v325 = vadd.f32 %v229, %v324
    %326 = vmatprep.mubr.f32.mxu0 %v44
    %327 = vmatmul.mubr.f32.gmra.mxu0 %v43
    %v328 = vpop.f32.mrf.mxu0
    %v329 = vadd.f32 %v225, %v328
    %v330 = vpop.f32.mrf.mxu0
    %v331 = vadd.f32 %v229, %v330
    %332 = vmatprep.mubr.f32.mxu0 %v48
    %333 = vmatmul.mubr.f32.gmra.mxu0 %v47
    %v334 = vpop.f32.mrf.mxu0
    %v335 = vadd.f32 %v225, %v334
    %v336 = vpop.f32.mrf.mxu0
    %v337 = vadd.f32 %v229, %v336
    %338 = vdwg.mxu0
    %339 = vmatprep.subr.mxu0 %v193
    %340 = vmatpush1.msra.mxu0 %v192
    %341 = vmatprep.subr.mxu0 %v190
    %342 = vmatpush1.msra.mxu0 %v189
    %343 = vmatprep.subr.mxu0 %v187
    %344 = vmatpush1.msra.mxu0 %v186
    %345 = vmatprep.subr.mxu0 %v184
    %346 = vmatpush1.msra.mxu0 %v183
    %347 = vmatprep.subr.mxu0 %v181
    %348 = vmatpush1.msra.mxu0 %v180
    %349 = vmatprep.subr.mxu0 %v178
    %350 = vmatpush1.msra.mxu0 %v177
    %351 = vmatprep.subr.mxu0 %v175
    %352 = vmatpush1.msra.mxu0 %v174
    %353 = vmatprep.subr.mxu0 %v172
    %354 = vmatpush1.msra.mxu0 %v171
    %355 = vmatprep.subr.mxu0 %v169
    %356 = vmatpush1.msra.mxu0 %v168
    %357 = vmatprep.subr.mxu0 %v166
    %358 = vmatpush1.msra.mxu0 %v165
    %359 = vmatprep.subr.mxu0 %v163
    %360 = vmatpush1.msra.mxu0 %v162
    %361 = vmatprep.subr.mxu0 %v160
    %362 = vmatpush1.msra.mxu0 %v159
    %363 = vmatprep.subr.mxu0 %v157
    %364 = vmatpush1.msra.mxu0 %v156
    %365 = vmatprep.subr.mxu0 %v154
    %366 = vmatpush1.msra.mxu0 %v153
    %367 = vmatprep.subr.mxu0 %v151
    %368 = vmatpush1.msra.mxu0 %v150
    %369 = vmatprep.subr.mxu0 %v148
    %370 = vmatpush1.msra.mxu0 %v147
    %371 = vmatprep.subr.mxu0 0.0
    %372 = vmatpush2.msra.mxu0 0.0
    %373 = vmatprep.subr.mxu0 0.0
    %374 = vmatpush2.msra.mxu0 0.0
    %375 = vmatprep.subr.mxu0 0.0
    %376 = vmatpush2.msra.mxu0 0.0
    %377 = vmatprep.subr.mxu0 0.0
    %378 = vmatpush2.msra.mxu0 0.0
    %379 = vmatprep.subr.mxu0 0.0
    %380 = vmatpush2.msra.mxu0 0.0
    %381 = vmatprep.subr.mxu0 0.0
    %382 = vmatpush2.msra.mxu0 0.0
    %383 = vmatprep.subr.mxu0 0.0
    %384 = vmatpush2.msra.mxu0 0.0
    %385 = vmatprep.subr.mxu0 0.0
    %386 = vmatpush2.msra.mxu0 0.0
    %387 = vmatprep.subr.mxu0 %v217
    %388 = vmatpush2.msra.mxu0 %v216
    %389 = vmatprep.subr.mxu0 %v214
    %390 = vmatpush2.msra.mxu0 %v213
    %391 = vmatprep.subr.mxu0 %v211
    %392 = vmatpush2.msra.mxu0 %v210
    %393 = vmatprep.subr.mxu0 %v208
    %394 = vmatpush2.msra.mxu0 %v207
    %395 = vmatprep.subr.mxu0 %v205
    %396 = vmatpush2.msra.mxu0 %v204
    %397 = vmatprep.subr.mxu0 %v202
    %398 = vmatpush2.msra.mxu0 %v201
    %399 = vmatprep.subr.mxu0 %v199
    %400 = vmatpush2.msra.mxu0 %v198
    %401 = vmatprep.subr.mxu0 %v196
    %402 = vmatpush2.msra.mxu0 %v195
    %403 = vmatprep.mubr.f32.mxu0 %v239
    %404 = vmatmul.mubr.f32.gmra.mxu0 %v37
    %v405 = vpop.f32.mrf.mxu0
    %v406 = vadd.f32 %v317, %v405
    %v407 = vpop.f32.mrf.mxu0
    %v408 = vadd.f32 %v319, %v407
    %409 = vmatprep.mubr.f32.mxu0 %v242
    %410 = vmatmul.mubr.f32.gmra.mxu0 %v41
    %v411 = vpop.f32.mrf.mxu0
    %v412 = vadd.f32 %v323, %v411
    %v413 = vpop.f32.mrf.mxu0
    %v414 = vadd.f32 %v325, %v413
    %415 = vmatprep.mubr.f32.mxu0 %v245
    %416 = vmatmul.mubr.f32.gmra.mxu0 %v45
    %v417 = vpop.f32.mrf.mxu0
    %v418 = vadd.f32 %v329, %v417
    %v419 = vpop.f32.mrf.mxu0
    %v420 = vadd.f32 %v331, %v419
    %421 = vmatprep.mubr.f32.mxu0 %v248
    %422 = vmatmul.mubr.f32.gmra.mxu0 %v49
    %v423 = vpop.f32.mrf.mxu0
    %v424 = vadd.f32 %v335, %v423
    %v425 = vpop.f32.mrf.mxu0
    %v426 = vadd.f32 %v337, %v425
    %427 = vdwg.mxu0
    %428 = vmatprep.subr.mxu0 0.0
    %429 = vmatpush1.msra.mxu0 %v98
    %430 = vmatprep.subr.mxu0 0.0
    %431 = vmatpush1.msra.mxu0 %v95
    %432 = vmatprep.subr.mxu0 0.0
    %433 = vmatpush1.msra.mxu0 %v92
    %434 = vmatprep.subr.mxu0 0.0
    %435 = vmatpush1.msra.mxu0 %v89
    %436 = vmatprep.subr.mxu0 0.0
    %437 = vmatpush1.msra.mxu0 %v86
    %438 = vmatprep.subr.mxu0 0.0
    %439 = vmatpush1.msra.mxu0 %v83
    %440 = vmatprep.subr.mxu0 0.0
    %441 = vmatpush1.msra.mxu0 %v80
    %442 = vmatprep.subr.mxu0 0.0
    %443 = vmatpush1.msra.mxu0 %v77
    %444 = vmatprep.subr.mxu0 0.0
    %445 = vmatpush1.msra.mxu0 %v74
    %446 = vmatprep.subr.mxu0 0.0
    %447 = vmatpush1.msra.mxu0 %v71
    %448 = vmatprep.subr.mxu0 0.0
    %449 = vmatpush1.msra.mxu0 %v68
    %450 = vmatprep.subr.mxu0 0.0
    %451 = vmatpush1.msra.mxu0 %v65
    %452 = vmatprep.subr.mxu0 0.0
    %453 = vmatpush1.msra.mxu0 %v62
    %454 = vmatprep.subr.mxu0 0.0
    %455 = vmatpush1.msra.mxu0 %v59
    %456 = vmatprep.subr.mxu0 0.0
    %457 = vmatpush1.msra.mxu0 %v56
    %458 = vmatprep.subr.mxu0 0.0
    %459 = vmatpush1.msra.mxu0 %v53
    %460 = vmatprep.subr.mxu0 0.0
    %461 = vmatpush2.msra.mxu0 %v146
    %462 = vmatprep.subr.mxu0 0.0
    %463 = vmatpush2.msra.mxu0 %v143
    %464 = vmatprep.subr.mxu0 0.0
    %465 = vmatpush2.msra.mxu0 %v140
    %466 = vmatprep.subr.mxu0 0.0
    %467 = vmatpush2.msra.mxu0 %v137
    %468 = vmatprep.subr.mxu0 0.0
    %469 = vmatpush2.msra.mxu0 %v134
    %470 = vmatprep.subr.mxu0 0.0
    %471 = vmatpush2.msra.mxu0 %v131
    %472 = vmatprep.subr.mxu0 0.0
    %473 = vmatpush2.msra.mxu0 %v128
    %474 = vmatprep.subr.mxu0 0.0
    %475 = vmatpush2.msra.mxu0 %v125
    %476 = vmatprep.subr.mxu0 0.0
    %477 = vmatpush2.msra.mxu0 %v122
    %478 = vmatprep.subr.mxu0 0.0
    %479 = vmatpush2.msra.mxu0 %v119
    %480 = vmatprep.subr.mxu0 0.0
    %481 = vmatpush2.msra.mxu0 %v116
    %482 = vmatprep.subr.mxu0 0.0
    %483 = vmatpush2.msra.mxu0 %v113
    %484 = vmatprep.subr.mxu0 0.0
    %485 = vmatpush2.msra.mxu0 %v110
    %486 = vmatprep.subr.mxu0 0.0
    %487 = vmatpush2.msra.mxu0 %v107
    %488 = vmatprep.subr.mxu0 0.0
    %489 = vmatpush2.msra.mxu0 %v104
    %490 = vmatprep.subr.mxu0 0.0
    %491 = vmatpush2.msra.mxu0 %v101
    %492 = vmatprep.mubr.f32.mxu0 %v36
    %493 = vmatmul.mubr.f32.gmra.mxu0 %v35
    %v494 = vpop.f32.mrf.mxu0
    %v495 = vadd.f32 %v233, %v494
    %v496 = vpop.f32.mrf.mxu0
    %497 = vmatprep.mubr.f32.mxu0 %v40
    %498 = vmatmul.mubr.f32.gmra.mxu0 %v39
    %v499 = vpop.f32.mrf.mxu0
    %v500 = vadd.f32 %v233, %v499
    %v501 = vpop.f32.mrf.mxu0
    %502 = vmatprep.mubr.f32.mxu0 %v44
    %503 = vmatmul.mubr.f32.gmra.mxu0 %v43
    %v504 = vpop.f32.mrf.mxu0
    %v505 = vadd.f32 %v233, %v504
    %v506 = vpop.f32.mrf.mxu0
    %507 = vmatprep.mubr.f32.mxu0 %v48
    %508 = vmatmul.mubr.f32.gmra.mxu0 %v47
    %v509 = vpop.f32.mrf.mxu0
    %v510 = vadd.f32 %v233, %v509
    %v511 = vpop.f32.mrf.mxu0
    %512 = vdwg.mxu0
    %513 = vmatprep.subr.mxu0 0.0
    %514 = vmatpush1.msra.mxu0 %v194
    %515 = vmatprep.subr.mxu0 0.0
    %516 = vmatpush1.msra.mxu0 %v191
    %517 = vmatprep.subr.mxu0 0.0
    %518 = vmatpush1.msra.mxu0 %v188
    %519 = vmatprep.subr.mxu0 0.0
    %520 = vmatpush1.msra.mxu0 %v185
    %521 = vmatprep.subr.mxu0 0.0
    %522 = vmatpush1.msra.mxu0 %v182
    %523 = vmatprep.subr.mxu0 0.0
    %524 = vmatpush1.msra.mxu0 %v179
    %525 = vmatprep.subr.mxu0 0.0
    %526 = vmatpush1.msra.mxu0 %v176
    %527 = vmatprep.subr.mxu0 0.0
    %528 = vmatpush1.msra.mxu0 %v173
    %529 = vmatprep.subr.mxu0 0.0
    %530 = vmatpush1.msra.mxu0 %v170
    %531 = vmatprep.subr.mxu0 0.0
    %532 = vmatpush1.msra.mxu0 %v167
    %533 = vmatprep.subr.mxu0 0.0
    %534 = vmatpush1.msra.mxu0 %v164
    %535 = vmatprep.subr.mxu0 0.0
    %536 = vmatpush1.msra.mxu0 %v161
    %537 = vmatprep.subr.mxu0 0.0
    %538 = vmatpush1.msra.mxu0 %v158
    %539 = vmatprep.subr.mxu0 0.0
    %540 = vmatpush1.msra.mxu0 %v155
    %541 = vmatprep.subr.mxu0 0.0
    %542 = vmatpush1.msra.mxu0 %v152
    %543 = vmatprep.subr.mxu0 0.0
    %544 = vmatpush1.msra.mxu0 %v149
    %545 = vmatprep.subr.mxu0 0.0
    %546 = vmatpush2.msra.mxu0 0.0
    %547 = vmatprep.subr.mxu0 0.0
    %548 = vmatpush2.msra.mxu0 0.0
    %549 = vmatprep.subr.mxu0 0.0
    %550 = vmatpush2.msra.mxu0 0.0
    %551 = vmatprep.subr.mxu0 0.0
    %552 = vmatpush2.msra.mxu0 0.0
    %553 = vmatprep.subr.mxu0 0.0
    %554 = vmatpush2.msra.mxu0 0.0
    %555 = vmatprep.subr.mxu0 0.0
    %556 = vmatpush2.msra.mxu0 0.0
    %557 = vmatprep.subr.mxu0 0.0
    %558 = vmatpush2.msra.mxu0 0.0
    %559 = vmatprep.subr.mxu0 0.0
    %560 = vmatpush2.msra.mxu0 0.0
    %561 = vmatprep.subr.mxu0 0.0
    %562 = vmatpush2.msra.mxu0 %v218
    %563 = vmatprep.subr.mxu0 0.0
    %564 = vmatpush2.msra.mxu0 %v215
    %565 = vmatprep.subr.mxu0 0.0
    %566 = vmatpush2.msra.mxu0 %v212
    %567 = vmatprep.subr.mxu0 0.0
    %568 = vmatpush2.msra.mxu0 %v209
    %569 = vmatprep.subr.mxu0 0.0
    %570 = vmatpush2.msra.mxu0 %v206
    %571 = vmatprep.subr.mxu0 0.0
    %572 = vmatpush2.msra.mxu0 %v203
    %573 = vmatprep.subr.mxu0 0.0
    %574 = vmatpush2.msra.mxu0 %v200
    %575 = vmatprep.subr.mxu0 0.0
    %576 = vmatpush2.msra.mxu0 %v197
    %577 = vmatprep.mubr.f32.mxu0 %v239
    %578 = vmatmul.mubr.f32.gmra.mxu0 %v37
    %v579 = vpop.f32.mrf.mxu0
    %v580 = vadd.f32 %v495, %v579
    %v581 = vpop.f32.mrf.mxu0
    %582 = vmatprep.mubr.f32.mxu0 %v242
    %583 = vmatmul.mubr.f32.gmra.mxu0 %v41
    %v584 = vpop.f32.mrf.mxu0
    %v585 = vadd.f32 %v500, %v584
    %v586 = vpop.f32.mrf.mxu0
    %587 = vmatprep.mubr.f32.mxu0 %v245
    %588 = vmatmul.mubr.f32.gmra.mxu0 %v45
    %v589 = vpop.f32.mrf.mxu0
    %v590 = vadd.f32 %v505, %v589
    %v591 = vpop.f32.mrf.mxu0
    %592 = vmatprep.mubr.f32.mxu0 %v248
    %593 = vmatmul.mubr.f32.gmra.mxu0 %v49
    %v594 = vpop.f32.mrf.mxu0
    %v595 = vadd.f32 %v510, %v594
    %v596 = vpop.f32.mrf.mxu0
    %597 = vdwg.mxu0
    %v598 = vmax.f32 %v406, 0.0
    %v599 = vmax.f32 %v408, 0.0
    %v600 = vmax.f32 %v580, 0.0
    %v601 = vmax.f32 %v412, 0.0
    %v602 = vmax.f32 %v414, 0.0
    %v603 = vmax.f32 %v585, 0.0
    %v604 = vmax.f32 %v418, 0.0
    %v605 = vmax.f32 %v420, 0.0
    %v606 = vmax.f32 %v590, 0.0
    %v607 = vmax.f32 %v424, 0.0
    %v608 = vmax.f32 %v426, 0.0
    %v609 = vmax.f32 %v595, 0.0
    %v610 = vld [vmem:[%s3] sm:$0xff]
    %v611 = vld [vmem:[%s3 + $0x8] sm:$0xff]
    %v612 = vld [vmem:[%s3 + $0x10] sm:$0xff]
    %v613 = vld [vmem:[%s3 + $0x18] sm:$0xff]
    %v614 = vld [vmem:[%s3 + $0x20] sm:$0xff]
    %v615 = vld [vmem:[%s3 + $0x28] sm:$0xff]
    %v616 = vld [vmem:[%s3 + $0x30] sm:$0xff]
    %v617 = vld [vmem:[%s3 + $0x38] sm:$0xff]
    %v618 = vld [vmem:[%s3 + $0x40] sm:$0xff]
    %v619 = vld [vmem:[%s3 + $0x48] sm:$0xff]
    %v620 = vld [vmem:[%s3 + $0x50] sm:$0xff]
    %v621 = vld [vmem:[%s3 + $0x58] sm:$0xff]
    %v622 = vld [vmem:[%s3 + $0x60] sm:$0xff]
    %v623 = vld [vmem:[%s3 + $0x68] sm:$0xff]
    %v624 = vld [vmem:[%s3 + $0x70] sm:$0xff]
    %v625 = vld [vmem:[%s3 + $0x78] sm:$0xff]
    %v626 = vld [vmem:[%s3 + $0x80] sm:$0xff]
    %v627 = vld [vmem:[%s3 + $0x88] sm:$0xff]
    %v628 = vld [vmem:[%s3 + $0x90] sm:$0xff]
    %v629 = vld [vmem:[%s3 + $0x98] sm:$0xff]
    %v630 = vld [vmem:[%s3 + $0xa0] sm:$0xff]
    %v631 = vld [vmem:[%s3 + $0xa8] sm:$0xff]
    %v632 = vld [vmem:[%s3 + $0xb0] sm:$0xff]
    %v633 = vld [vmem:[%s3 + $0xb8] sm:$0xff]
    %v634 = vld [vmem:[%s3 + $0xc0] sm:$0xff]
    %v635 = vld [vmem:[%s3 + $0xc8] sm:$0xff]
    %v636 = vld [vmem:[%s3 + $0xd0] sm:$0xff]
    %v637 = vld [vmem:[%s3 + $0xd8] sm:$0xff]
    %v638 = vld [vmem:[%s3 + $0xe0] sm:$0xff]
    %v639 = vld [vmem:[%s3 + $0xe8] sm:$0xff]
    %v640 = vld [vmem:[%s3 + $0xf0] sm:$0xff]
    %v641 = vld [vmem:[%s3 + $0xf8] sm:$0xff]
    %v642 = vld [vmem:[%s3 + $0x100] sm:$0xff]
    %v643 = vld [vmem:[%s3 + $0x108] sm:$0xff]
    %v644 = vld [vmem:[%s3 + $0x110] sm:$0xff]
    %v645 = vld [vmem:[%s3 + $0x118] sm:$0xff]
    %v646 = vld [vmem:[%s3 + $0x120] sm:$0x1]
    %v647 = vlaneseq
    %v648 = vshrl.u32 %v647, 7
    %v649 = vsub.s32 0, %v648
    %v650 = vrot.slane %v646, %v649
    %vm651 = vcmask 261120
    %v653 = vsel %vm651, %v600, 0
    %v656 = vsel %vm651, %v603, 0
    %v659 = vsel %vm651, %v606, 0
    %v662 = vsel %vm651, %v609, 0
    %664 = vmatprep.subr.mxu0 0.0
    %665 = vmatpush1.msra.mxu0 %v625
    %666 = vmatprep.subr.mxu0 0.0
    %667 = vmatpush1.msra.mxu0 %v624
    %668 = vmatprep.subr.mxu0 0.0
    %669 = vmatpush1.msra.mxu0 %v623
    %670 = vmatprep.subr.mxu0 0.0
    %671 = vmatpush1.msra.mxu0 %v622
    %672 = vmatprep.subr.mxu0 0.0
    %673 = vmatpush1.msra.mxu0 %v621
    %674 = vmatprep.subr.mxu0 0.0
    %675 = vmatpush1.msra.mxu0 %v620
    %676 = vmatprep.subr.mxu0 0.0
    %677 = vmatpush1.msra.mxu0 %v619
    %678 = vmatprep.subr.mxu0 0.0
    %679 = vmatpush1.msra.mxu0 %v618
    %680 = vmatprep.subr.mxu0 0.0
    %681 = vmatpush1.msra.mxu0 %v617
    %682 = vmatprep.subr.mxu0 0.0
    %683 = vmatpush1.msra.mxu0 %v616
    %684 = vmatprep.subr.mxu0 0.0
    %685 = vmatpush1.msra.mxu0 %v615
    %686 = vmatprep.subr.mxu0 0.0
    %687 = vmatpush1.msra.mxu0 %v614
    %688 = vmatprep.subr.mxu0 0.0
    %689 = vmatpush1.msra.mxu0 %v613
    %690 = vmatprep.subr.mxu0 0.0
    %691 = vmatpush1.msra.mxu0 %v612
    %692 = vmatprep.subr.mxu0 0.0
    %693 = vmatpush1.msra.mxu0 %v611
    %694 = vmatprep.subr.mxu0 0.0
    %695 = vmatpush1.msra.mxu0 %v610
    %696 = vmatprep.subr.mxu0 0.0
    %697 = vmatpush2.msra.mxu0 %v641
    %698 = vmatprep.subr.mxu0 0.0
    %699 = vmatpush2.msra.mxu0 %v640
    %700 = vmatprep.subr.mxu0 0.0
    %701 = vmatpush2.msra.mxu0 %v639
    %702 = vmatprep.subr.mxu0 0.0
    %703 = vmatpush2.msra.mxu0 %v638
    %704 = vmatprep.subr.mxu0 0.0
    %705 = vmatpush2.msra.mxu0 %v637
    %706 = vmatprep.subr.mxu0 0.0
    %707 = vmatpush2.msra.mxu0 %v636
    %708 = vmatprep.subr.mxu0 0.0
    %709 = vmatpush2.msra.mxu0 %v635
    %710 = vmatprep.subr.mxu0 0.0
    %711 = vmatpush2.msra.mxu0 %v634
    %712 = vmatprep.subr.mxu0 0.0
    %713 = vmatpush2.msra.mxu0 %v633
    %714 = vmatprep.subr.mxu0 0.0
    %715 = vmatpush2.msra.mxu0 %v632
    %716 = vmatprep.subr.mxu0 0.0
    %717 = vmatpush2.msra.mxu0 %v631
    %718 = vmatprep.subr.mxu0 0.0
    %719 = vmatpush2.msra.mxu0 %v630
    %720 = vmatprep.subr.mxu0 0.0
    %721 = vmatpush2.msra.mxu0 %v629
    %722 = vmatprep.subr.mxu0 0.0
    %723 = vmatpush2.msra.mxu0 %v628
    %724 = vmatprep.subr.mxu0 0.0
    %725 = vmatpush2.msra.mxu0 %v627
    %726 = vmatprep.subr.mxu0 0.0
    %727 = vmatpush2.msra.mxu0 %v626
    %728 = vmatprep.mubr.f32.mxu0 %v599
    %729 = vmatmul.mubr.f32.gmra.mxu0 %v598
    %v730 = vpop.f32.mrf.mxu0
    %v731 = vadd.f32 %v650, %v730
    %v732 = vpop.f32.mrf.mxu0
    %733 = vmatprep.mubr.f32.mxu0 %v602
    %734 = vmatmul.mubr.f32.gmra.mxu0 %v601
    %v735 = vpop.f32.mrf.mxu0
    %v736 = vadd.f32 %v650, %v735
    %v737 = vpop.f32.mrf.mxu0
    %738 = vmatprep.mubr.f32.mxu0 %v605
    %739 = vmatmul.mubr.f32.gmra.mxu0 %v604
    %v740 = vpop.f32.mrf.mxu0
    %v741 = vadd.f32 %v650, %v740
    %v742 = vpop.f32.mrf.mxu0
    %743 = vmatprep.mubr.f32.mxu0 %v608
    %744 = vmatmul.mubr.f32.gmra.mxu0 %v607
    %v745 = vpop.f32.mrf.mxu0
    %v746 = vadd.f32 %v650, %v745
    %v747 = vpop.f32.mrf.mxu0
    %748 = vdwg.mxu0
    %749 = vmatprep.subr.mxu0 0.0
    %750 = vmatpush1.msra.mxu0 0.0
    %751 = vmatprep.subr.mxu0 0.0
    %752 = vmatpush1.msra.mxu0 0.0
    %753 = vmatprep.subr.mxu0 0.0
    %754 = vmatpush1.msra.mxu0 0.0
    %755 = vmatprep.subr.mxu0 0.0
    %756 = vmatpush1.msra.mxu0 0.0
    %757 = vmatprep.subr.mxu0 0.0
    %758 = vmatpush1.msra.mxu0 0.0
    %759 = vmatprep.subr.mxu0 0.0
    %760 = vmatpush1.msra.mxu0 0.0
    %761 = vmatprep.subr.mxu0 0.0
    %762 = vmatpush1.msra.mxu0 0.0
    %763 = vmatprep.subr.mxu0 0.0
    %764 = vmatpush1.msra.mxu0 0.0
    %765 = vmatprep.subr.mxu0 0.0
    %766 = vmatpush1.msra.mxu0 0.0
    %767 = vmatprep.subr.mxu0 0.0
    %768 = vmatpush1.msra.mxu0 0.0
    %769 = vmatprep.subr.mxu0 0.0
    %770 = vmatpush1.msra.mxu0 0.0
    %771 = vmatprep.subr.mxu0 0.0
    %772 = vmatpush1.msra.mxu0 0.0
    %773 = vmatprep.subr.mxu0 0.0
    %774 = vmatpush1.msra.mxu0 %v645
    %775 = vmatprep.subr.mxu0 0.0
    %776 = vmatpush1.msra.mxu0 %v644
    %777 = vmatprep.subr.mxu0 0.0
    %778 = vmatpush1.msra.mxu0 %v643
    %779 = vmatprep.subr.mxu0 0.0
    %780 = vmatpush1.msra.mxu0 %v642
    %781 = vmatprep.subr.mxu0 0.0
    %782 = vmatpush2.msra.mxu0 0.0
    %783 = vmatprep.subr.mxu0 0.0
    %784 = vmatpush2.msra.mxu0 0.0
    %785 = vmatprep.subr.mxu0 0.0
    %786 = vmatpush2.msra.mxu0 0.0
    %787 = vmatprep.subr.mxu0 0.0
    %788 = vmatpush2.msra.mxu0 0.0
    %789 = vmatprep.subr.mxu0 0.0
    %790 = vmatpush2.msra.mxu0 0.0
    %791 = vmatprep.subr.mxu0 0.0
    %792 = vmatpush2.msra.mxu0 0.0
    %793 = vmatprep.subr.mxu0 0.0
    %794 = vmatpush2.msra.mxu0 0.0
    %795 = vmatprep.subr.mxu0 0.0
    %796 = vmatpush2.msra.mxu0 0.0
    %797 = vmatprep.subr.mxu0 0.0
    %798 = vmatpush2.msra.mxu0 0.0
    %799 = vmatprep.subr.mxu0 0.0
    %800 = vmatpush2.msra.mxu0 0.0
    %801 = vmatprep.subr.mxu0 0.0
    %802 = vmatpush2.msra.mxu0 0.0
    %803 = vmatprep.subr.mxu0 0.0
    %804 = vmatpush2.msra.mxu0 0.0
    %805 = vmatprep.subr.mxu0 0.0
    %806 = vmatpush2.msra.mxu0 0.0
    %807 = vmatprep.subr.mxu0 0.0
    %808 = vmatpush2.msra.mxu0 0.0
    %809 = vmatprep.subr.mxu0 0.0
    %810 = vmatpush2.msra.mxu0 0.0
    %811 = vmatprep.subr.mxu0 0.0
    %812 = vmatpush2.msra.mxu0 0.0
    %813 = vmatprep.mubr.f32.mxu0 0.0
    %814 = vmatmul.mubr.f32.gmra.mxu0 %v653
    %v815 = vpop.f32.mrf.mxu0
    %v816 = vadd.f32 %v731, %v815
    %v817 = vpop.f32.mrf.mxu0
    %818 = vmatprep.mubr.f32.mxu0 0.0
    %819 = vmatmul.mubr.f32.gmra.mxu0 %v656
    %v820 = vpop.f32.mrf.mxu0
    %v821 = vadd.f32 %v736, %v820
    %v822 = vpop.f32.mrf.mxu0
    %823 = vmatprep.mubr.f32.mxu0 0.0
    %824 = vmatmul.mubr.f32.gmra.mxu0 %v659
    %v825 = vpop.f32.mrf.mxu0
    %v826 = vadd.f32 %v741, %v825
    %v827 = vpop.f32.mrf.mxu0
    %828 = vmatprep.mubr.f32.mxu0 0.0
    %829 = vmatmul.mubr.f32.gmra.mxu0 %v662
    %v830 = vpop.f32.mrf.mxu0
    %v831 = vadd.f32 %v746, %v830
    %v832 = vpop.f32.mrf.mxu0
    %833 = vdwg.mxu0
    %v834 = vmax.f32 %v816, 0.0
    %v835 = vmax.f32 %v821, 0.0
    %v836 = vmax.f32 %v826, 0.0
    %v837 = vmax.f32 %v831, 0.0
    %v838 = vld [vmem:[%s4] sm:$0xff]
    %v839 = vld [vmem:[%s4 + $0x8] sm:$0xff]
    %v840 = vld [vmem:[%s4 + $0x10] sm:$0xff]
    %v841 = vld [vmem:[%s4 + $0x18] sm:$0xff]
    %v842 = vld [vmem:[%s4 + $0x20] sm:$0xff]
    %v843 = vld [vmem:[%s4 + $0x28] sm:$0xff]
    %v844 = vld [vmem:[%s4 + $0x30] sm:$0xff]
    %v845 = vld [vmem:[%s4 + $0x38] sm:$0xff]
    %v846 = vld [vmem:[%s4 + $0x40] sm:$0xff]
    %v847 = vld [vmem:[%s4 + $0x48] sm:$0xff]
    %vm848 = vcmask 654336
    %v850 = vsel %vm848, %v834, 0
    %v853 = vsel %vm848, %v835, 0
    %v856 = vsel %vm848, %v836, 0
    %v859 = vsel %vm848, %v837, 0
    %861 = vmatprep.subr.mxu0 0.0
    %862 = vmatpush1.msra.mxu0 0.0
    %863 = vmatprep.subr.mxu0 0.0
    %864 = vmatpush1.msra.mxu0 0.0
    %865 = vmatprep.subr.mxu0 0.0
    %866 = vmatpush1.msra.mxu0 0.0
    %867 = vmatprep.subr.mxu0 0.0
    %868 = vmatpush1.msra.mxu0 0.0
    %869 = vmatprep.subr.mxu0 0.0
    %870 = vmatpush1.msra.mxu0 0.0
    %871 = vmatprep.subr.mxu0 0.0
    %872 = vmatpush1.msra.mxu0 0.0
    %873 = vmatprep.subr.mxu0 0.0
    %874 = vmatpush1.msra.mxu0 %v847
    %875 = vmatprep.subr.mxu0 0.0
    %876 = vmatpush1.msra.mxu0 %v846
    %877 = vmatprep.subr.mxu0 0.0
    %878 = vmatpush1.msra.mxu0 %v845
    %879 = vmatprep.subr.mxu0 0.0
    %880 = vmatpush1.msra.mxu0 %v844
    %881 = vmatprep.subr.mxu0 0.0
    %882 = vmatpush1.msra.mxu0 %v843
    %883 = vmatprep.subr.mxu0 0.0
    %884 = vmatpush1.msra.mxu0 %v842
    %885 = vmatprep.subr.mxu0 0.0
    %886 = vmatpush1.msra.mxu0 %v841
    %887 = vmatprep.subr.mxu0 0.0
    %888 = vmatpush1.msra.mxu0 %v840
    %889 = vmatprep.subr.mxu0 0.0
    %890 = vmatpush1.msra.mxu0 %v839
    %891 = vmatprep.subr.mxu0 0.0
    %892 = vmatpush1.msra.mxu0 %v838
    %893 = vmatprep.subr.mxu0 0.0
    %894 = vmatpush2.msra.mxu0 0.0
    %895 = vmatprep.subr.mxu0 0.0
    %896 = vmatpush2.msra.mxu0 0.0
    %897 = vmatprep.subr.mxu0 0.0
    %898 = vmatpush2.msra.mxu0 0.0
    %899 = vmatprep.subr.mxu0 0.0
    %900 = vmatpush2.msra.mxu0 0.0
    %901 = vmatprep.subr.mxu0 0.0
    %902 = vmatpush2.msra.mxu0 0.0
    %903 = vmatprep.subr.mxu0 0.0
    %904 = vmatpush2.msra.mxu0 0.0
    %905 = vmatprep.subr.mxu0 0.0
    %906 = vmatpush2.msra.mxu0 0.0
    %907 = vmatprep.subr.mxu0 0.0
    %908 = vmatpush2.msra.mxu0 0.0
    %909 = vmatprep.subr.mxu0 0.0
    %910 = vmatpush2.msra.mxu0 0.0
    %911 = vmatprep.subr.mxu0 0.0
    %912 = vmatpush2.msra.mxu0 0.0
    %913 = vmatprep.subr.mxu0 0.0
    %914 = vmatpush2.msra.mxu0 0.0
    %915 = vmatprep.subr.mxu0 0.0
    %916 = vmatpush2.msra.mxu0 0.0
    %917 = vmatprep.subr.mxu0 0.0
    %918 = vmatpush2.msra.mxu0 0.0
    %919 = vmatprep.subr.mxu0 0.0
    %920 = vmatpush2.msra.mxu0 0.0
    %921 = vmatprep.subr.mxu0 0.0
    %922 = vmatpush2.msra.mxu0 0.0
    %923 = vmatprep.subr.mxu0 0.0
    %924 = vmatpush2.msra.mxu0 0.0
    %925 = vmatprep.mubr.f32.mxu0 0.0
    %926 = vmatmul.mubr.f32.gmra.mxu0 %v850
    %v927 = vpop.f32.mrf.mxu0
    %v928 = vadd.f32 0.0, %v927
    %v929 = vpop.f32.mrf.mxu0
    %930 = vmatprep.mubr.f32.mxu0 0.0
    %931 = vmatmul.mubr.f32.gmra.mxu0 %v853
    %v932 = vpop.f32.mrf.mxu0
    %v933 = vadd.f32 0.0, %v932
    %v934 = vpop.f32.mrf.mxu0
    %935 = vmatprep.mubr.f32.mxu0 0.0
    %936 = vmatmul.mubr.f32.gmra.mxu0 %v856
    %v937 = vpop.f32.mrf.mxu0
    %v938 = vadd.f32 0.0, %v937
    %v939 = vpop.f32.mrf.mxu0
    %940 = vmatprep.mubr.f32.mxu0 0.0
    %941 = vmatmul.mubr.f32.gmra.mxu0 %v859
    %v942 = vpop.f32.mrf.mxu0
    %v943 = vadd.f32 0.0, %v942
    %v944 = vpop.f32.mrf.mxu0
    %945 = vdwg.mxu0
    %v946 = vld [vmem:[%s4 + $0x50] sm:$0xff]
    %v947 = vld [vmem:[%s4 + $0x58] sm:$0xff]
    %v948 = vld [vmem:[%s4 + $0x60] sm:$0xff]
    %v949 = vld [vmem:[%s4 + $0x68] sm:$0xff]
    %v950 = vmul.f32 %v928, %v946
    %v951 = vmul.f32 %v933, %v947
    %v952 = vmul.f32 %v938, %v948
    %v953 = vmul.f32 %v943, %v949
    %v954 = vld [vmem:[%s4 + $0x70] sm:$0x3]
    %v956 = vsel %vm651, %v954, 0
    %958 = vmatprep.subr.mxu0 0.0
    %959 = vmatpush1.msra.mxu0 0.0
    %960 = vmatprep.subr.mxu0 0.0
    %961 = vmatpush1.msra.mxu0 0.0
    %962 = vmatprep.subr.mxu0 0.0
    %963 = vmatpush1.msra.mxu0 0.0
    %964 = vmatprep.subr.mxu0 0.0
    %965 = vmatpush1.msra.mxu0 0.0
    %966 = vmatprep.subr.mxu0 0.0
    %967 = vmatpush1.msra.mxu0 0.0
    %968 = vmatprep.subr.mxu0 0.0
    %969 = vmatpush1.msra.mxu0 0.0
    %970 = vmatprep.subr.mxu0 0.0
    %971 = vmatpush1.msra.mxu0 0.0
    %972 = vmatprep.subr.mxu0 0.0
    %973 = vmatpush1.msra.mxu0 0.0
    %974 = vmatprep.subr.mxu0 0.0
    %975 = vmatpush1.msra.mxu0 0.0
    %976 = vmatprep.subr.mxu0 0.0
    %977 = vmatpush1.msra.mxu0 0.0
    %978 = vmatprep.subr.mxu0 0.0
    %979 = vmatpush1.msra.mxu0 0.0
    %980 = vmatprep.subr.mxu0 0.0
    %981 = vmatpush1.msra.mxu0 0.0
    %982 = vmatprep.subr.mxu0 0.0
    %983 = vmatpush1.msra.mxu0 %v953
    %984 = vmatprep.subr.mxu0 0.0
    %985 = vmatpush1.msra.mxu0 %v952
    %986 = vmatprep.subr.mxu0 0.0
    %987 = vmatpush1.msra.mxu0 %v951
    %988 = vmatprep.subr.mxu0 0.0
    %989 = vmatpush1.msra.mxu0 %v950
    %990 = vmatprep.subr.mxu0 0.0
    %991 = vmatpush2.msra.mxu0 0.0
    %992 = vmatprep.subr.mxu0 0.0
    %993 = vmatpush2.msra.mxu0 0.0
    %994 = vmatprep.subr.mxu0 0.0
    %995 = vmatpush2.msra.mxu0 0.0
    %996 = vmatprep.subr.mxu0 0.0
    %997 = vmatpush2.msra.mxu0 0.0
    %998 = vmatprep.subr.mxu0 0.0
    %999 = vmatpush2.msra.mxu0 0.0
    %1000 = vmatprep.subr.mxu0 0.0
    %1001 = vmatpush2.msra.mxu0 0.0
    %1002 = vmatprep.subr.mxu0 0.0
    %1003 = vmatpush2.msra.mxu0 0.0
    %1004 = vmatprep.subr.mxu0 0.0
    %1005 = vmatpush2.msra.mxu0 0.0
    %1006 = vmatprep.subr.mxu0 0.0
    %1007 = vmatpush2.msra.mxu0 0.0
    %1008 = vmatprep.subr.mxu0 0.0
    %1009 = vmatpush2.msra.mxu0 0.0
    %1010 = vmatprep.subr.mxu0 0.0
    %1011 = vmatpush2.msra.mxu0 0.0
    %1012 = vmatprep.subr.mxu0 0.0
    %1013 = vmatpush2.msra.mxu0 0.0
    %1014 = vmatprep.subr.mxu0 0.0
    %1015 = vmatpush2.msra.mxu0 0.0
    %1016 = vmatprep.subr.mxu0 0.0
    %1017 = vmatpush2.msra.mxu0 0.0
    %1018 = vmatprep.subr.mxu0 0.0
    %1019 = vmatpush2.msra.mxu0 0.0
    %1020 = vmatprep.subr.mxu0 0.0
    %1021 = vmatpush2.msra.mxu0 0.0
    %1022 = vmatprep.mubr.f32.mxu0 0.0
    %1023 = vmatmul.mubr.f32.gmra.mxu0 %v956
    %v1024 = vpop.f32.mrf.mxu0
    %v1025 = vadd.f32 0.0, %v1024
    %v1026 = vpop.f32.mrf.mxu0
    %1027 = vdwg.mxu0
    %v1028 = vld [vmem:[%s4 + $0x78] sm:$0xff]
    %v1029 = vld [vmem:[%s4 + $0x80] sm:$0xff]
    %v1030 = vld [vmem:[%s4 + $0x88] sm:$0xff]
    %v1031 = vld [vmem:[%s4 + $0x90] sm:$0xff]
    %v1032 = vld [vmem:[%s4 + $0x98] sm:$0xff]
    %v1033 = vld [vmem:[%s4 + $0xa0] sm:$0xff]
    %v1034 = vld [vmem:[%s4 + $0xa8] sm:$0xff]
    %v1035 = vld [vmem:[%s4 + $0xb0] sm:$0xff]
    %v1036 = vld [vmem:[%s4 + $0x168] sm:$0x1]
    %v1037 = vlaneseq
    %v1038 = vshrl.u32 %v1037, 7
    %v1039 = vsub.s32 0, %v1038
    %v1040 = vrot.slane %v1036, %v1039
    %v1042 = vsel %vm237, %v1025, 0
    %1044 = vmatprep.subr.mxu0 0.0
    %1045 = vmatpush1.msra.mxu0 0.0
    %1046 = vmatprep.subr.mxu0 0.0
    %1047 = vmatpush1.msra.mxu0 0.0
    %1048 = vmatprep.subr.mxu0 0.0
    %1049 = vmatpush1.msra.mxu0 0.0
    %1050 = vmatprep.subr.mxu0 0.0
    %1051 = vmatpush1.msra.mxu0 0.0
    %1052 = vmatprep.subr.mxu0 0.0
    %1053 = vmatpush1.msra.mxu0 0.0
    %1054 = vmatprep.subr.mxu0 0.0
    %1055 = vmatpush1.msra.mxu0 0.0
    %1056 = vmatprep.subr.mxu0 0.0
    %1057 = vmatpush1.msra.mxu0 0.0
    %1058 = vmatprep.subr.mxu0 0.0
    %1059 = vmatpush1.msra.mxu0 0.0
    %1060 = vmatprep.subr.mxu0 0.0
    %1061 = vmatpush1.msra.mxu0 %v1035
    %1062 = vmatprep.subr.mxu0 0.0
    %1063 = vmatpush1.msra.mxu0 %v1034
    %1064 = vmatprep.subr.mxu0 0.0
    %1065 = vmatpush1.msra.mxu0 %v1033
    %1066 = vmatprep.subr.mxu0 0.0
    %1067 = vmatpush1.msra.mxu0 %v1032
    %1068 = vmatprep.subr.mxu0 0.0
    %1069 = vmatpush1.msra.mxu0 %v1031
    %1070 = vmatprep.subr.mxu0 0.0
    %1071 = vmatpush1.msra.mxu0 %v1030
    %1072 = vmatprep.subr.mxu0 0.0
    %1073 = vmatpush1.msra.mxu0 %v1029
    %1074 = vmatprep.subr.mxu0 0.0
    %1075 = vmatpush1.msra.mxu0 %v1028
    %1076 = vmatprep.subr.mxu0 0.0
    %1077 = vmatpush2.msra.mxu0 0.0
    %1078 = vmatprep.subr.mxu0 0.0
    %1079 = vmatpush2.msra.mxu0 0.0
    %1080 = vmatprep.subr.mxu0 0.0
    %1081 = vmatpush2.msra.mxu0 0.0
    %1082 = vmatprep.subr.mxu0 0.0
    %1083 = vmatpush2.msra.mxu0 0.0
    %1084 = vmatprep.subr.mxu0 0.0
    %1085 = vmatpush2.msra.mxu0 0.0
    %1086 = vmatprep.subr.mxu0 0.0
    %1087 = vmatpush2.msra.mxu0 0.0
    %1088 = vmatprep.subr.mxu0 0.0
    %1089 = vmatpush2.msra.mxu0 0.0
    %1090 = vmatprep.subr.mxu0 0.0
    %1091 = vmatpush2.msra.mxu0 0.0
    %1092 = vmatprep.subr.mxu0 0.0
    %1093 = vmatpush2.msra.mxu0 0.0
    %1094 = vmatprep.subr.mxu0 0.0
    %1095 = vmatpush2.msra.mxu0 0.0
    %1096 = vmatprep.subr.mxu0 0.0
    %1097 = vmatpush2.msra.mxu0 0.0
    %1098 = vmatprep.subr.mxu0 0.0
    %1099 = vmatpush2.msra.mxu0 0.0
    %1100 = vmatprep.subr.mxu0 0.0
    %1101 = vmatpush2.msra.mxu0 0.0
    %1102 = vmatprep.subr.mxu0 0.0
    %1103 = vmatpush2.msra.mxu0 0.0
    %1104 = vmatprep.subr.mxu0 0.0
    %1105 = vmatpush2.msra.mxu0 0.0
    %1106 = vmatprep.subr.mxu0 0.0
    %1107 = vmatpush2.msra.mxu0 0.0
    %1108 = vmatprep.mubr.f32.mxu0 0.0
    %1109 = vmatmul.mubr.f32.gmra.mxu0 %v1042
    %v1110 = vpop.f32.mrf.mxu0
    %v1111 = vadd.f32 %v1040, %v1110
    %v1112 = vpop.f32.mrf.mxu0
    %1113 = vdwg.mxu0
    %v1114 = vmax.f32 %v1111, 0.0
    %v1115 = vld [vmem:[%s4 + $0xb8] sm:$0xf]
    %v1116 = vld [vmem:[%s4 + $0x170] sm:$0x1]
    %v1117 = vlaneseq
    %v1118 = vshrl.u32 %v1117, 7
    %v1119 = vsub.s32 0, %v1118
    %v1120 = vrot.slane %v1116, %v1119
    %vm1121 = vcmask 31744
    %v1123 = vsel %vm1121, %v1114, 0
    %vm1125 = vcmask 1043456
    %v1127 = vsel %vm1125, %v1115, 0
    %1129 = vmatprep.subr.mxu0 0.0
    %1130 = vmatpush1.msra.mxu0 0.0
    %1131 = vmatprep.subr.mxu0 0.0
    %1132 = vmatpush1.msra.mxu0 0.0
    %1133 = vmatprep.subr.mxu0 0.0
    %1134 = vmatpush1.msra.mxu0 0.0
    %1135 = vmatprep.subr.mxu0 0.0
    %1136 = vmatpush1.msra.mxu0 0.0
    %1137 = vmatprep.subr.mxu0 0.0
    %1138 = vmatpush1.msra.mxu0 0.0
    %1139 = vmatprep.subr.mxu0 0.0
    %1140 = vmatpush1.msra.mxu0 0.0
    %1141 = vmatprep.subr.mxu0 0.0
    %1142 = vmatpush1.msra.mxu0 0.0
    %1143 = vmatprep.subr.mxu0 0.0
    %1144 = vmatpush1.msra.mxu0 0.0
    %1145 = vmatprep.subr.mxu0 0.0
    %1146 = vmatpush1.msra.mxu0 0.0
    %1147 = vmatprep.subr.mxu0 0.0
    %1148 = vmatpush1.msra.mxu0 0.0
    %1149 = vmatprep.subr.mxu0 0.0
    %1150 = vmatpush1.msra.mxu0 0.0
    %1151 = vmatprep.subr.mxu0 0.0
    %1152 = vmatpush1.msra.mxu0 0.0
    %1153 = vmatprep.subr.mxu0 0.0
    %1154 = vmatpush1.msra.mxu0 0.0
    %1155 = vmatprep.subr.mxu0 0.0
    %1156 = vmatpush1.msra.mxu0 0.0
    %1157 = vmatprep.subr.mxu0 0.0
    %1158 = vmatpush1.msra.mxu0 0.0
    %1159 = vmatprep.subr.mxu0 0.0
    %1160 = vmatpush1.msra.mxu0 %v1127
    %1161 = vmatprep.subr.mxu0 0.0
    %1162 = vmatpush2.msra.mxu0 0.0
    %1163 = vmatprep.subr.mxu0 0.0
    %1164 = vmatpush2.msra.mxu0 0.0
    %1165 = vmatprep.subr.mxu0 0.0
    %1166 = vmatpush2.msra.mxu0 0.0
    %1167 = vmatprep.subr.mxu0 0.0
    %1168 = vmatpush2.msra.mxu0 0.0
    %1169 = vmatprep.subr.mxu0 0.0
    %1170 = vmatpush2.msra.mxu0 0.0
    %1171 = vmatprep.subr.mxu0 0.0
    %1172 = vmatpush2.msra.mxu0 0.0
    %1173 = vmatprep.subr.mxu0 0.0
    %1174 = vmatpush2.msra.mxu0 0.0
    %1175 = vmatprep.subr.mxu0 0.0
    %1176 = vmatpush2.msra.mxu0 0.0
    %1177 = vmatprep.subr.mxu0 0.0
    %1178 = vmatpush2.msra.mxu0 0.0
    %1179 = vmatprep.subr.mxu0 0.0
    %1180 = vmatpush2.msra.mxu0 0.0
    %1181 = vmatprep.subr.mxu0 0.0
    %1182 = vmatpush2.msra.mxu0 0.0
    %1183 = vmatprep.subr.mxu0 0.0
    %1184 = vmatpush2.msra.mxu0 0.0
    %1185 = vmatprep.subr.mxu0 0.0
    %1186 = vmatpush2.msra.mxu0 0.0
    %1187 = vmatprep.subr.mxu0 0.0
    %1188 = vmatpush2.msra.mxu0 0.0
    %1189 = vmatprep.subr.mxu0 0.0
    %1190 = vmatpush2.msra.mxu0 0.0
    %1191 = vmatprep.subr.mxu0 0.0
    %1192 = vmatpush2.msra.mxu0 0.0
    %1193 = vmatprep.mubr.f32.mxu0 0.0
    %1194 = vmatmul.mubr.f32.gmra.mxu0 %v1123
    %v1195 = vpop.f32.mrf.mxu0
    %v1196 = vadd.f32 %v1120, %v1195
    %v1197 = vpop.f32.mrf.mxu0
    %1198 = vdwg.mxu0
    %v1199 = vmax.f32 %v1196, 0.0
    %v1200 = vld [vmem:[%s4 + $0xc0] sm:$0xff]
    %v1201 = vld [vmem:[%s4 + $0xc8] sm:$0xff]
    %v1202 = vld [vmem:[%s4 + $0xd0] sm:$0xff]
    %v1203 = vld [vmem:[%s4 + $0xd8] sm:$0xff]
    %v1204 = vld [vmem:[%s4 + $0xe0] sm:$0xff]
    %v1205 = vld [vmem:[%s4 + $0xe8] sm:$0xff]
    %v1206 = vld [vmem:[%s4 + $0xf0] sm:$0xff]
    %v1207 = vld [vmem:[%s4 + $0xf8] sm:$0xff]
    %v1208 = vld [vmem:[%s4 + $0x178] sm:$0x1]
    %v1209 = vlaneseq
    %v1210 = vshrl.u32 %v1209, 7
    %v1211 = vsub.s32 0, %v1210
    %v1212 = vrot.slane %v1208, %v1211
    %v1214 = vsel %vm237, %v1199, 0
    %1216 = vmatprep.subr.mxu0 0.0
    %1217 = vmatpush1.msra.mxu0 0.0
    %1218 = vmatprep.subr.mxu0 0.0
    %1219 = vmatpush1.msra.mxu0 0.0
    %1220 = vmatprep.subr.mxu0 0.0
    %1221 = vmatpush1.msra.mxu0 0.0
    %1222 = vmatprep.subr.mxu0 0.0
    %1223 = vmatpush1.msra.mxu0 0.0
    %1224 = vmatprep.subr.mxu0 0.0
    %1225 = vmatpush1.msra.mxu0 0.0
    %1226 = vmatprep.subr.mxu0 0.0
    %1227 = vmatpush1.msra.mxu0 0.0
    %1228 = vmatprep.subr.mxu0 0.0
    %1229 = vmatpush1.msra.mxu0 0.0
    %1230 = vmatprep.subr.mxu0 0.0
    %1231 = vmatpush1.msra.mxu0 0.0
    %1232 = vmatprep.subr.mxu0 0.0
    %1233 = vmatpush1.msra.mxu0 %v1207
    %1234 = vmatprep.subr.mxu0 0.0
    %1235 = vmatpush1.msra.mxu0 %v1206
    %1236 = vmatprep.subr.mxu0 0.0
    %1237 = vmatpush1.msra.mxu0 %v1205
    %1238 = vmatprep.subr.mxu0 0.0
    %1239 = vmatpush1.msra.mxu0 %v1204
    %1240 = vmatprep.subr.mxu0 0.0
    %1241 = vmatpush1.msra.mxu0 %v1203
    %1242 = vmatprep.subr.mxu0 0.0
    %1243 = vmatpush1.msra.mxu0 %v1202
    %1244 = vmatprep.subr.mxu0 0.0
    %1245 = vmatpush1.msra.mxu0 %v1201
    %1246 = vmatprep.subr.mxu0 0.0
    %1247 = vmatpush1.msra.mxu0 %v1200
    %1248 = vmatprep.subr.mxu0 0.0
    %1249 = vmatpush2.msra.mxu0 0.0
    %1250 = vmatprep.subr.mxu0 0.0
    %1251 = vmatpush2.msra.mxu0 0.0
    %1252 = vmatprep.subr.mxu0 0.0
    %1253 = vmatpush2.msra.mxu0 0.0
    %1254 = vmatprep.subr.mxu0 0.0
    %1255 = vmatpush2.msra.mxu0 0.0
    %1256 = vmatprep.subr.mxu0 0.0
    %1257 = vmatpush2.msra.mxu0 0.0
    %1258 = vmatprep.subr.mxu0 0.0
    %1259 = vmatpush2.msra.mxu0 0.0
    %1260 = vmatprep.subr.mxu0 0.0
    %1261 = vmatpush2.msra.mxu0 0.0
    %1262 = vmatprep.subr.mxu0 0.0
    %1263 = vmatpush2.msra.mxu0 0.0
    %1264 = vmatprep.subr.mxu0 0.0
    %1265 = vmatpush2.msra.mxu0 0.0
    %1266 = vmatprep.subr.mxu0 0.0
    %1267 = vmatpush2.msra.mxu0 0.0
    %1268 = vmatprep.subr.mxu0 0.0
    %1269 = vmatpush2.msra.mxu0 0.0
    %1270 = vmatprep.subr.mxu0 0.0
    %1271 = vmatpush2.msra.mxu0 0.0
    %1272 = vmatprep.subr.mxu0 0.0
    %1273 = vmatpush2.msra.mxu0 0.0
    %1274 = vmatprep.subr.mxu0 0.0
    %1275 = vmatpush2.msra.mxu0 0.0
    %1276 = vmatprep.subr.mxu0 0.0
    %1277 = vmatpush2.msra.mxu0 0.0
    %1278 = vmatprep.subr.mxu0 0.0
    %1279 = vmatpush2.msra.mxu0 0.0
    %1280 = vmatprep.mubr.f32.mxu0 0.0
    %1281 = vmatmul.mubr.f32.gmra.mxu0 %v1214
    %v1282 = vpop.f32.mrf.mxu0
    %v1283 = vadd.f32 %v1212, %v1282
    %v1284 = vpop.f32.mrf.mxu0
    %1285 = vdwg.mxu0
    %v1286 = vmax.f32 %v1283, 0.0
    %v1287 = vld [vmem:[%s1] sm:$0xff]
    %v1288 = vld [vmem:[%s1 + $0x8] sm:$0xff]
    %v1289 = vld [vmem:[%s4 + $0x100] sm:$0xf]
    %v1290 = vld [vmem:[%s4 + $0x180] sm:$0x1]
    %v1291 = vlaneseq
    %v1292 = vshrl.u32 %v1291, 7
    %v1293 = vsub.s32 0, %v1292
    %v1294 = vrot.slane %v1290, %v1293
    %v1296 = vsel %vm1121, %v1287, 0
    %v1299 = vsel %vm1121, %v1288, 0
    %v1302 = vsel %vm1125, %v1289, 0
    %1304 = vmatprep.subr.mxu0 0.0
    %1305 = vmatpush1.msra.mxu0 0.0
    %1306 = vmatprep.subr.mxu0 0.0
    %1307 = vmatpush1.msra.mxu0 0.0
    %1308 = vmatprep.subr.mxu0 0.0
    %1309 = vmatpush1.msra.mxu0 0.0
    %1310 = vmatprep.subr.mxu0 0.0
    %1311 = vmatpush1.msra.mxu0 0.0
    %1312 = vmatprep.subr.mxu0 0.0
    %1313 = vmatpush1.msra.mxu0 0.0
    %1314 = vmatprep.subr.mxu0 0.0
    %1315 = vmatpush1.msra.mxu0 0.0
    %1316 = vmatprep.subr.mxu0 0.0
    %1317 = vmatpush1.msra.mxu0 0.0
    %1318 = vmatprep.subr.mxu0 0.0
    %1319 = vmatpush1.msra.mxu0 0.0
    %1320 = vmatprep.subr.mxu0 0.0
    %1321 = vmatpush1.msra.mxu0 0.0
    %1322 = vmatprep.subr.mxu0 0.0
    %1323 = vmatpush1.msra.mxu0 0.0
    %1324 = vmatprep.subr.mxu0 0.0
    %1325 = vmatpush1.msra.mxu0 0.0
    %1326 = vmatprep.subr.mxu0 0.0
    %1327 = vmatpush1.msra.mxu0 0.0
    %1328 = vmatprep.subr.mxu0 0.0
    %1329 = vmatpush1.msra.mxu0 0.0
    %1330 = vmatprep.subr.mxu0 0.0
    %1331 = vmatpush1.msra.mxu0 0.0
    %1332 = vmatprep.subr.mxu0 0.0
    %1333 = vmatpush1.msra.mxu0 0.0
    %1334 = vmatprep.subr.mxu0 0.0
    %1335 = vmatpush1.msra.mxu0 %v1302
    %1336 = vmatprep.subr.mxu0 0.0
    %1337 = vmatpush2.msra.mxu0 0.0
    %1338 = vmatprep.subr.mxu0 0.0
    %1339 = vmatpush2.msra.mxu0 0.0
    %1340 = vmatprep.subr.mxu0 0.0
    %1341 = vmatpush2.msra.mxu0 0.0
    %1342 = vmatprep.subr.mxu0 0.0
    %1343 = vmatpush2.msra.mxu0 0.0
    %1344 = vmatprep.subr.mxu0 0.0
    %1345 = vmatpush2.msra.mxu0 0.0
    %1346 = vmatprep.subr.mxu0 0.0
    %1347 = vmatpush2.msra.mxu0 0.0
    %1348 = vmatprep.subr.mxu0 0.0
    %1349 = vmatpush2.msra.mxu0 0.0
    %1350 = vmatprep.subr.mxu0 0.0
    %1351 = vmatpush2.msra.mxu0 0.0
    %1352 = vmatprep.subr.mxu0 0.0
    %1353 = vmatpush2.msra.mxu0 0.0
    %1354 = vmatprep.subr.mxu0 0.0
    %1355 = vmatpush2.msra.mxu0 0.0
    %1356 = vmatprep.subr.mxu0 0.0
    %1357 = vmatpush2.msra.mxu0 0.0
    %1358 = vmatprep.subr.mxu0 0.0
    %1359 = vmatpush2.msra.mxu0 0.0
    %1360 = vmatprep.subr.mxu0 0.0
    %1361 = vmatpush2.msra.mxu0 0.0
    %1362 = vmatprep.subr.mxu0 0.0
    %1363 = vmatpush2.msra.mxu0 0.0
    %1364 = vmatprep.subr.mxu0 0.0
    %1365 = vmatpush2.msra.mxu0 0.0
    %1366 = vmatprep.subr.mxu0 0.0
    %1367 = vmatpush2.msra.mxu0 0.0
    %1368 = vmatprep.mubr.f32.mxu0 0.0
    %1369 = vmatmul.mubr.f32.gmra.mxu0 %v1296
    %v1370 = vpop.f32.mrf.mxu0
    %v1371 = vadd.f32 %v1294, %v1370
    %v1372 = vpop.f32.mrf.mxu0
    %1373 = vmatprep.mubr.f32.mxu0 0.0
    %1374 = vmatmul.mubr.f32.gmra.mxu0 %v1299
    %v1375 = vpop.f32.mrf.mxu0
    %v1376 = vadd.f32 %v1294, %v1375
    %v1377 = vpop.f32.mrf.mxu0
    %1378 = vdwg.mxu0
    %v1379 = vmax.f32 %v1371, 0.0
    %v1380 = vmax.f32 %v1376, 0.0
    %v1381 = vld [vmem:[%s4 + $0x108] sm:$0xff]
    %v1382 = vld [vmem:[%s4 + $0x110] sm:$0xff]
    %v1383 = vld [vmem:[%s4 + $0x118] sm:$0xff]
    %v1384 = vld [vmem:[%s4 + $0x120] sm:$0xff]
    %v1385 = vld [vmem:[%s4 + $0x188] sm:$0x1]
    %v1386 = vlaneseq
    %v1387 = vshrl.u32 %v1386, 7
    %v1388 = vsub.s32 0, %v1387
    %v1389 = vrot.slane %v1385, %v1388
    %v1391 = vsel %vm651, %v1379, 0
    %v1394 = vsel %vm651, %v1380, 0
    %1396 = vmatprep.subr.mxu0 0.0
    %1397 = vmatpush1.msra.mxu0 0.0
    %1398 = vmatprep.subr.mxu0 0.0
    %1399 = vmatpush1.msra.mxu0 0.0
    %1400 = vmatprep.subr.mxu0 0.0
    %1401 = vmatpush1.msra.mxu0 0.0
    %1402 = vmatprep.subr.mxu0 0.0
    %1403 = vmatpush1.msra.mxu0 0.0
    %1404 = vmatprep.subr.mxu0 0.0
    %1405 = vmatpush1.msra.mxu0 0.0
    %1406 = vmatprep.subr.mxu0 0.0
    %1407 = vmatpush1.msra.mxu0 0.0
    %1408 = vmatprep.subr.mxu0 0.0
    %1409 = vmatpush1.msra.mxu0 0.0
    %1410 = vmatprep.subr.mxu0 0.0
    %1411 = vmatpush1.msra.mxu0 0.0
    %1412 = vmatprep.subr.mxu0 0.0
    %1413 = vmatpush1.msra.mxu0 0.0
    %1414 = vmatprep.subr.mxu0 0.0
    %1415 = vmatpush1.msra.mxu0 0.0
    %1416 = vmatprep.subr.mxu0 0.0
    %1417 = vmatpush1.msra.mxu0 0.0
    %1418 = vmatprep.subr.mxu0 0.0
    %1419 = vmatpush1.msra.mxu0 0.0
    %1420 = vmatprep.subr.mxu0 0.0
    %1421 = vmatpush1.msra.mxu0 %v1384
    %1422 = vmatprep.subr.mxu0 0.0
    %1423 = vmatpush1.msra.mxu0 %v1383
    %1424 = vmatprep.subr.mxu0 0.0
    %1425 = vmatpush1.msra.mxu0 %v1382
    %1426 = vmatprep.subr.mxu0 0.0
    %1427 = vmatpush1.msra.mxu0 %v1381
    %1428 = vmatprep.subr.mxu0 0.0
    %1429 = vmatpush2.msra.mxu0 0.0
    %1430 = vmatprep.subr.mxu0 0.0
    %1431 = vmatpush2.msra.mxu0 0.0
    %1432 = vmatprep.subr.mxu0 0.0
    %1433 = vmatpush2.msra.mxu0 0.0
    %1434 = vmatprep.subr.mxu0 0.0
    %1435 = vmatpush2.msra.mxu0 0.0
    %1436 = vmatprep.subr.mxu0 0.0
    %1437 = vmatpush2.msra.mxu0 0.0
    %1438 = vmatprep.subr.mxu0 0.0
    %1439 = vmatpush2.msra.mxu0 0.0
    %1440 = vmatprep.subr.mxu0 0.0
    %1441 = vmatpush2.msra.mxu0 0.0
    %1442 = vmatprep.subr.mxu0 0.0
    %1443 = vmatpush2.msra.mxu0 0.0
    %1444 = vmatprep.subr.mxu0 0.0
    %1445 = vmatpush2.msra.mxu0 0.0
    %1446 = vmatprep.subr.mxu0 0.0
    %1447 = vmatpush2.msra.mxu0 0.0
    %1448 = vmatprep.subr.mxu0 0.0
    %1449 = vmatpush2.msra.mxu0 0.0
    %1450 = vmatprep.subr.mxu0 0.0
    %1451 = vmatpush2.msra.mxu0 0.0
    %1452 = vmatprep.subr.mxu0 0.0
    %1453 = vmatpush2.msra.mxu0 0.0
    %1454 = vmatprep.subr.mxu0 0.0
    %1455 = vmatpush2.msra.mxu0 0.0
    %1456 = vmatprep.subr.mxu0 0.0
    %1457 = vmatpush2.msra.mxu0 0.0
    %1458 = vmatprep.subr.mxu0 0.0
    %1459 = vmatpush2.msra.mxu0 0.0
    %1460 = vmatprep.mubr.f32.mxu0 0.0
    %1461 = vmatmul.mubr.f32.gmra.mxu0 %v1391
    %v1462 = vpop.f32.mrf.mxu0
    %v1463 = vadd.f32 %v1389, %v1462
    %v1464 = vpop.f32.mrf.mxu0
    %1465 = vmatprep.mubr.f32.mxu0 0.0
    %1466 = vmatmul.mubr.f32.gmra.mxu0 %v1394
    %v1467 = vpop.f32.mrf.mxu0
    %v1468 = vadd.f32 %v1389, %v1467
    %v1469 = vpop.f32.mrf.mxu0
    %1470 = vdwg.mxu0
    %v1471 = vmax.f32 %v1463, 0.0
    %v1472 = vmax.f32 %v1468, 0.0
    %v1473 = vld [vmem:[%s4 + $0x128] sm:$0xff]
    %v1474 = vld [vmem:[%s4 + $0x130] sm:$0xff]
    %v1475 = vld [vmem:[%s4 + $0x138] sm:$0xff]
    %v1476 = vld [vmem:[%s4 + $0x140] sm:$0xff]
    %v1477 = vld [vmem:[%s4 + $0x148] sm:$0xff]
    %v1478 = vld [vmem:[%s4 + $0x150] sm:$0xff]
    %v1479 = vld [vmem:[%s4 + $0x158] sm:$0xff]
    %v1480 = vld [vmem:[%s4 + $0x160] sm:$0xff]
    %v1481 = vld [vmem:[%s4 + $0x190] sm:$0x1]
    %v1482 = vlaneseq
    %v1483 = vshrl.u32 %v1482, 7
    %v1484 = vsub.s32 0, %v1483
    %v1485 = vrot.slane %v1481, %v1484
    %v1487 = vsel %vm237, %v1471, 0
    %v1490 = vsel %vm237, %v1472, 0
    %1492 = vmatprep.subr.mxu0 0.0
    %1493 = vmatpush1.msra.mxu0 0.0
    %1494 = vmatprep.subr.mxu0 0.0
    %1495 = vmatpush1.msra.mxu0 0.0
    %1496 = vmatprep.subr.mxu0 0.0
    %1497 = vmatpush1.msra.mxu0 0.0
    %1498 = vmatprep.subr.mxu0 0.0
    %1499 = vmatpush1.msra.mxu0 0.0
    %1500 = vmatprep.subr.mxu0 0.0
    %1501 = vmatpush1.msra.mxu0 0.0
    %1502 = vmatprep.subr.mxu0 0.0
    %1503 = vmatpush1.msra.mxu0 0.0
    %1504 = vmatprep.subr.mxu0 0.0
    %1505 = vmatpush1.msra.mxu0 0.0
    %1506 = vmatprep.subr.mxu0 0.0
    %1507 = vmatpush1.msra.mxu0 0.0
    %1508 = vmatprep.subr.mxu0 0.0
    %1509 = vmatpush1.msra.mxu0 %v1480
    %1510 = vmatprep.subr.mxu0 0.0
    %1511 = vmatpush1.msra.mxu0 %v1479
    %1512 = vmatprep.subr.mxu0 0.0
    %1513 = vmatpush1.msra.mxu0 %v1478
    %1514 = vmatprep.subr.mxu0 0.0
    %1515 = vmatpush1.msra.mxu0 %v1477
    %1516 = vmatprep.subr.mxu0 0.0
    %1517 = vmatpush1.msra.mxu0 %v1476
    %1518 = vmatprep.subr.mxu0 0.0
    %1519 = vmatpush1.msra.mxu0 %v1475
    %1520 = vmatprep.subr.mxu0 0.0
    %1521 = vmatpush1.msra.mxu0 %v1474
    %1522 = vmatprep.subr.mxu0 0.0
    %1523 = vmatpush1.msra.mxu0 %v1473
    %1524 = vmatprep.subr.mxu0 0.0
    %1525 = vmatpush2.msra.mxu0 0.0
    %1526 = vmatprep.subr.mxu0 0.0
    %1527 = vmatpush2.msra.mxu0 0.0
    %1528 = vmatprep.subr.mxu0 0.0
    %1529 = vmatpush2.msra.mxu0 0.0
    %1530 = vmatprep.subr.mxu0 0.0
    %1531 = vmatpush2.msra.mxu0 0.0
    %1532 = vmatprep.subr.mxu0 0.0
    %1533 = vmatpush2.msra.mxu0 0.0
    %1534 = vmatprep.subr.mxu0 0.0
    %1535 = vmatpush2.msra.mxu0 0.0
    %1536 = vmatprep.subr.mxu0 0.0
    %1537 = vmatpush2.msra.mxu0 0.0
    %1538 = vmatprep.subr.mxu0 0.0
    %1539 = vmatpush2.msra.mxu0 0.0
    %1540 = vmatprep.subr.mxu0 0.0
    %1541 = vmatpush2.msra.mxu0 0.0
    %1542 = vmatprep.subr.mxu0 0.0
    %1543 = vmatpush2.msra.mxu0 0.0
    %1544 = vmatprep.subr.mxu0 0.0
    %1545 = vmatpush2.msra.mxu0 0.0
    %1546 = vmatprep.subr.mxu0 0.0
    %1547 = vmatpush2.msra.mxu0 0.0
    %1548 = vmatprep.subr.mxu0 0.0
    %1549 = vmatpush2.msra.mxu0 0.0
    %1550 = vmatprep.subr.mxu0 0.0
    %1551 = vmatpush2.msra.mxu0 0.0
    %1552 = vmatprep.subr.mxu0 0.0
    %1553 = vmatpush2.msra.mxu0 0.0
    %1554 = vmatprep.subr.mxu0 0.0
    %1555 = vmatpush2.msra.mxu0 0.0
    %1556 = vmatprep.mubr.f32.mxu0 0.0
    %1557 = vmatmul.mubr.f32.gmra.mxu0 %v1487
    %v1558 = vpop.f32.mrf.mxu0
    %v1559 = vadd.f32 %v1485, %v1558
    %v1560 = vpop.f32.mrf.mxu0
    %1561 = vmatprep.mubr.f32.mxu0 0.0
    %1562 = vmatmul.mubr.f32.gmra.mxu0 %v1490
    %v1563 = vpop.f32.mrf.mxu0
    %v1564 = vadd.f32 %v1485, %v1563
    %v1565 = vpop.f32.mrf.mxu0
    %1566 = vdwg.mxu0
    %v1567 = vmax.f32 %v1559, 0.0
    %v1568 = vmax.f32 %v1564, 0.0
    %v1570 = vsel %vm1121, %v1567, 0
    %v1573 = vsel %vm1121, %v1568, 0
    %1575 = vmatprep.subr.mxu0 0.0
    %1576 = vmatpush1.xpose.msra.mxu0 0.0
    %1577 = vmatprep.subr.mxu0 0.0
    %1578 = vmatpush1.xpose.msra.mxu0 0.0
    %1579 = vmatprep.subr.mxu0 0.0
    %1580 = vmatpush1.xpose.msra.mxu0 0.0
    %1581 = vmatprep.subr.mxu0 0.0
    %1582 = vmatpush1.xpose.msra.mxu0 0.0
    %1583 = vmatprep.subr.mxu0 0.0
    %1584 = vmatpush1.xpose.msra.mxu0 0.0
    %1585 = vmatprep.subr.mxu0 0.0
    %1586 = vmatpush1.xpose.msra.mxu0 0.0
    %1587 = vmatprep.subr.mxu0 0.0
    %1588 = vmatpush1.xpose.msra.mxu0 0.0
    %1589 = vmatprep.subr.mxu0 0.0
    %1590 = vmatpush1.xpose.msra.mxu0 0.0
    %1591 = vmatprep.subr.mxu0 0.0
    %1592 = vmatpush1.xpose.msra.mxu0 0.0
    %1593 = vmatprep.subr.mxu0 0.0
    %1594 = vmatpush1.xpose.msra.mxu0 0.0
    %1595 = vmatprep.subr.mxu0 0.0
    %1596 = vmatpush1.xpose.msra.mxu0 0.0
    %1597 = vmatprep.subr.mxu0 0.0
    %1598 = vmatpush1.xpose.msra.mxu0 0.0
    %1599 = vmatprep.subr.mxu0 0.0
    %1600 = vmatpush1.xpose.msra.mxu0 0.0
    %1601 = vmatprep.subr.mxu0 0.0
    %1602 = vmatpush1.xpose.msra.mxu0 0.0
    %1603 = vmatprep.subr.mxu0 0.0
    %1604 = vmatpush1.xpose.msra.mxu0 %v1573
    %1605 = vmatprep.subr.mxu0 0.0
    %1606 = vmatpush1.xpose.msra.mxu0 %v1570
    %1607 = vmatprep.subr.mxu0 0.0
    %1608 = vmatpush2.xpose.msra.mxu0 0.0
    %1609 = vmatprep.subr.mxu0 0.0
    %1610 = vmatpush2.xpose.msra.mxu0 0.0
    %1611 = vmatprep.subr.mxu0 0.0
    %1612 = vmatpush2.xpose.msra.mxu0 0.0
    %1613 = vmatprep.subr.mxu0 0.0
    %1614 = vmatpush2.xpose.msra.mxu0 0.0
    %1615 = vmatprep.subr.mxu0 0.0
    %1616 = vmatpush2.xpose.msra.mxu0 0.0
    %1617 = vmatprep.subr.mxu0 0.0
    %1618 = vmatpush2.xpose.msra.mxu0 0.0
    %1619 = vmatprep.subr.mxu0 0.0
    %1620 = vmatpush2.xpose.msra.mxu0 0.0
    %1621 = vmatprep.subr.mxu0 0.0
    %1622 = vmatpush2.xpose.msra.mxu0 0.0
    %1623 = vmatprep.subr.mxu0 0.0
    %1624 = vmatpush2.xpose.msra.mxu0 0.0
    %1625 = vmatprep.subr.mxu0 0.0
    %1626 = vmatpush2.xpose.msra.mxu0 0.0
    %1627 = vmatprep.subr.mxu0 0.0
    %1628 = vmatpush2.xpose.msra.mxu0 0.0
    %1629 = vmatprep.subr.mxu0 0.0
    %1630 = vmatpush2.xpose.msra.mxu0 0.0
    %1631 = vmatprep.subr.mxu0 0.0
    %1632 = vmatpush2.xpose.msra.mxu0 0.0
    %1633 = vmatprep.subr.mxu0 0.0
    %1634 = vmatpush2.xpose.msra.mxu0 0.0
    %1635 = vmatprep.subr.mxu0 0.0
    %1636 = vmatpush2.xpose.msra.mxu0 0.0
    %1637 = vmatprep.subr.mxu0 0.0
    %1638 = vmatpush2.xpose.msra.mxu0 0.0
    %1639 = vmatprep.mubr.f32.mxu0 0.0
    %1640 = vmatmul.mubr.f32.gmra.mxu0 %v1123
    %v1641 = vpop.f32.mrf.mxu0
    %v1642 = vadd.f32 0.0, %v1641
    %v1643 = vpop.f32.mrf.mxu0
    %1644 = vdwg.mxu0
    %1646 = vset.pattern.permute.xlu0 0
    %1647 = vperm.xlu0 %1646, %v1286
    %v1648 = vpop.permute.xlu0 %1647
    %v1650 = vadd.f32 %v1648, %v1642
    %vm1651 = vcmask 57344
    %1652 = vst.msk [vmem:[#allocation5] sm:$0x1] %vm1651, %v1650
    %1654 = vrot.lane.b32.xlu0 %v1650, 120
    %v1655 = vpop.permute.xlu0 %1654
    %vm1657 = vcmask 58369
    %1658 = vst.msk [vmem:[#allocation5] sm:$0x2] %vm1657, %v1655
    // Predicated region
    $region26: #{_lambda_.1} parent=1 // pred_check
      _
    $region27: #{_lambda_.1} parent=1 // pred_check_branch
      %1660 = sbr.rel (0) target = $region29
    $region28: #{_lambda_.1} parent=1 // pred_region
      %s1662 = ssub.s32 32, 32
      %1663 = vsyncadd [#allocation4], %s1662
      %s1665 = sshll.u32 [#allocation5], 4
      %s1666 = int_to_ptr.vmem [resolvable:$true] %s1665
      %1668 = dma.vmem_to_hbm [thread:$0]  %s1666, 32, %s5, [#allocation4]
    $region29: #{_lambda_.1} parent=1 // pred_fallthru
      _
    // Predicated region
    $region30: #{_lambda_.1} parent=1 // pred_check
      _
    $region31: #{_lambda_.1} parent=1 // pred_check_branch
      %1670 = sbr.rel (0) target = $region33
    $region32: #{_lambda_.1} parent=1 // pred_region
      %1671 = dma.done [#allocation4], 32
    $region33: #{_lambda_.1} parent=1 // pred_fallthru
      _
    %1672 = vsyncpa [#allocation3], 1
    %1673 = vsyncpa [#allocation4], 1

</llo_original>
